<compile_context>
chip_gen: v5e
topology: v5e:2x2
jax: 0.10.0
libtpu: 0.0.40
codegen_flags: <defaults>
</compile_context>

<pallas_src>
import functools

import jax
import jax.numpy as jnp
from jax.experimental import pallas as pl
from jax.experimental.pallas import tpu as pltpu


def _st_eiconv_kernel(out_feats,
                      axx_ref, ayy_ref, wxx_ref, wyy_ref,
                      rhsa_ref, rhsx_ref, rhsy_ref, dst_ref, out_ref):
    f32 = jnp.float32
    o = out_feats

    # Adjacency strips arrive as int8 (HBM-traffic compression); edge counts
    # are exact after the cast.  The casts run in VPU slack.
    axx = axx_ref[...].astype(jnp.bfloat16)
    ayy = ayy_ref[...].astype(jnp.bfloat16)

    # Two accumulated dots rather than materializing (adj_xx + adj_yy): no
    # (TM, N) add temp / extra store pass, and the MXU has plenty of slack
    # because the kernel is HBM-bound.
    #   rhsa = [e_mul_h | e_mul_h @ w_h @ w_out]   ->  q = [h | h-part of rain]
    rhsa = rhsa_ref[...]
    q = (jnp.dot(axx, rhsa, preferred_element_type=f32)
         + jnp.dot(ayy, rhsa, preferred_element_type=f32))          # (tm, o+1)

    #   rhsx = [e @ w_gx @ w_out | 1]  ->  px = [W_xx @ (...) | rowsum(W_xx)]
    px = jnp.dot(wxx_ref[...], rhsx_ref[...], preferred_element_type=f32)
    py = jnp.dot(wyy_ref[...], rhsy_ref[...], preferred_element_type=f32)

    dst = dst_ref[...]            # (tm, 3) f32: [e_dst@w_gx@w_out | e_dst@w_gy@w_out | rain0]

    # activation is None -> h is the raw aggregation.
    h_t = q[:, :o]

    # grad @ w_g @ w_out == W @ (e @ w_g @ w_out) - rowsum(W) * (e_dst @ w_g @ w_out)
    # activation_edge is None -> Rainfall_in/Rainfall_out fold is exact.
    rain = (q[:, o:o + 1]
            + px[:, 0:1] - px[:, 1:2] * dst[:, 0:1]
            + py[:, 0:1] - py[:, 1:2] * dst[:, 1:2]
            + dst[:, 2:3])

    # Packed output slab: [h | rainfall_modified]
    out_ref[:, :o] = h_t
    out_ref[:, o:o + 1] = rain


def _pick_tm(n, vmem_limit, requested=None):
    """Row-tile size from the VMEM budget (remainder tile allowed)."""
    if requested is None:
        # Working set ~ 20 bytes per (dst_row, src) element: 2 int8 + 2 bf16
        # strips, double buffered, plus bf16 cast temps / f32 accumulators.
        requested = max(128, min(1024, vmem_limit // max(1, 20 * n)))
        # TODO(synk): for very large N (>= ~32k) add a second "arbitrary"
        # source-block grid axis with an f32 VMEM accumulator instead of
        # shrinking TM below 128.
    tm = min(int(requested), 1024, n)
    if tm >= n:
        return n
    tm = max(32, (tm // 32) * 32)          # int8 strips pack (32, 128) tiles
    # Prefer an exact divisor near the target (avoids the remainder tile),
    # otherwise keep the target and let Pallas mask the partial last block.
    for cand in range(tm, 31, -32):
        if n % cand == 0:
            return cand
    return min(tm, n)


def st_eiconv_spgrad(h_feat, e_feat, rain0, adj_xx, adj_yy, w_xx, w_yy, params,
                     *, tm=None):
    """Returns (rainfall_modified (N, 1), h (N, out_feats))."""
    f32 = jnp.float32
    N, in_feats = h_feat.shape
    edge_feats = e_feat.shape[1]

    wt = params['transform_h'].astype(f32)       # (in+edge, out)
    wrin = params['rainfall_in'].astype(f32)     # (out+2*edge, 2*out)
    wrout = params['rainfall_out'].astype(f32)   # (2*out, 1)
    out_feats = wt.shape[1]

    # ---- fold the small weights once, in f32 (exact: activations are None) --
    w_h = wrin[:out_feats]                            # (out, 2*out)
    w_gx = wrin[out_feats:out_feats + edge_feats]     # (edge, 2*out)
    w_gy = wrin[out_feats + edge_feats:]              # (edge, 2*out)
    w_h_out = w_h @ wrout                             # (out, 1)
    w_gx_out = w_gx @ wrout                           # (edge, 1)
    w_gy_out = w_gy @ wrout                           # (edge, 1)

    # ---- per-node RHS slabs, built once in the wrapper (O(N*feats) work) ----
    h32 = h_feat.astype(f32)
    e32 = e_feat.astype(f32)
    e_mul_h = h32 @ wt[:in_feats] + e32 @ wt[in_feats:]               # (N, out)
    rhs_adj = jnp.concatenate([e_mul_h, e_mul_h @ w_h_out], axis=1)   # (N, out+1)
    rhs_adj = rhs_adj.astype(jnp.bfloat16)
    gx = e32 @ w_gx_out                                               # (N, 1)
    gy = e32 @ w_gy_out                                               # (N, 1)
    ones = jnp.ones((N, 1), f32)
    rhs_x = jnp.concatenate([gx, ones], axis=1).astype(jnp.bfloat16)  # (N, 2)
    rhs_y = jnp.concatenate([gy, ones], axis=1).astype(jnp.bfloat16)  # (N, 2)
    dst = jnp.concatenate([gx, gy, rain0.reshape(-1, 1).astype(f32)],
                          axis=1)                                     # (N, 3) f32

    # ---- compress the O(N^2) HBM streams ------------------------------------
    axx = adj_xx.astype(jnp.int8)        # edge counts: exact in int8
    ayy = adj_yy.astype(jnp.int8)
    wxx = w_xx.astype(jnp.bfloat16)      # edge weights: bf16, native MXU input
    wyy = w_yy.astype(jnp.bfloat16)

    # ---- per-generation VMEM budget & tile size ------------------------------
    try:
        vmem_cap = int(pltpu.get_tpu_info().vmem_capacity_bytes)
    except Exception:
        vmem_cap = 64 * 1024 * 1024
    # ~102 MiB on 128-MiB chips (v5e/v6e), ~51 MiB on 64-MiB chips (v7x):
    # leaves headroom for compiler scratch.
    vmem_limit = int(min(vmem_cap * 0.8, vmem_cap - (8 << 20)))

    tm = _pick_tm(N, vmem_limit, tm)
    grid = (pl.cdiv(N, tm),)

    def rows(arr):          # (TM, cols) strips over destination rows
        return pl.BlockSpec((tm, arr.shape[1]), lambda i: (i, 0))

    def full(arr):          # small VMEM residents, fetched once
        return pl.BlockSpec(arr.shape, lambda i: (0, 0))

    in_arrays = (axx, ayy, wxx, wyy, rhs_adj, rhs_x, rhs_y, dst)
    in_specs = [rows(axx), rows(ayy), rows(wxx), rows(wyy),
                full(rhs_adj), full(rhs_x), full(rhs_y), rows(dst)]

    # Memory-bound cost hint for the XLA scheduler.
    flops = 4 * N * N * (out_feats + 3)
    bytes_accessed = 6 * N * N + N * (4 * out_feats + 32)
    cost = pl.CostEstimate(flops=flops, transcendentals=0,
                           bytes_accessed=int(bytes_accessed))

    kernel = functools.partial(_st_eiconv_kernel, out_feats)
    packed = pl.pallas_call(
        kernel,
        out_shape=jax.ShapeDtypeStruct((N, out_feats + 1), jnp.float32),
        grid_spec=pltpu.PrefetchScalarGridSpec(
            num_scalar_prefetch=0,
            grid=grid,
            in_specs=in_specs,
            out_specs=pl.BlockSpec((tm, out_feats + 1), lambda i: (i, 0)),
        ),
        compiler_params=pltpu.CompilerParams(
            # TODO(synk): on v7x, confirm from a profile that the row axis is
            # sharded across both TensorCores; if one TC is idle switch this
            # to (pltpu.CORE_PARALLEL,).
            dimension_semantics=("parallel",),
            vmem_limit_bytes=vmem_limit,
        ),
        cost_estimate=cost,
    )(*in_arrays)

    h_out = packed[:, :out_feats]
    rain = packed[:, out_feats:]
    return rain, h_out


if __name__ == "__main__":
    key = jax.random.PRNGKey(0)
    N, in_feats, out_feats, edge_feats = 256, 8, 8, 4
    keys = jax.random.split(key, 12)

    h_feat = jax.random.normal(keys[0], (N, in_feats), jnp.float32)
    e_feat = jax.random.normal(keys[1], (N, edge_feats), jnp.float32)
    rain0 = jax.random.normal(keys[2], (N,), jnp.float32)

    # Dense synthetic graph: binary adjacency (dst, src) per etype + edge weights 'w'.
    adj_xx = (jax.random.uniform(keys[3], (N, N)) < 0.3).astype(jnp.float32)
    adj_yy = (jax.random.uniform(keys[4], (N, N)) < 0.3).astype(jnp.float32)
    w_xx = adj_xx * jax.random.uniform(keys[5], (N, N), jnp.float32)
    w_yy = adj_yy * jax.random.uniform(keys[6], (N, N), jnp.float32)

    def linear_w(k, fan_in, fan_out):
        # nn.Linear default init bound (1/sqrt(fan_in)), stored transposed (fan_in, fan_out).
        b = 1.0 / float(fan_in) ** 0.5
        return jax.random.uniform(k, (fan_in, fan_out), jnp.float32, -b, b)

    def xavier(k, fan_in, fan_out):
        b = (6.0 / (fan_in + fan_out)) ** 0.5
        return jax.random.uniform(k, (fan_in, fan_out), jnp.float32, -b, b)

    params = {
        # weight0e / weight0h exist on the module but are unused in forward.
        'weight0e': xavier(keys[7], edge_feats, 64),
        'weight0h': xavier(keys[8], in_feats, 64),
        'transform_h': linear_w(keys[9], in_feats + edge_feats, out_feats),
        'rainfall_in': linear_w(keys[10], out_feats + 2 * edge_feats, 2 * out_feats),
        'rainfall_out': linear_w(keys[11], 2 * out_feats, 1),
    }

    rain, h = st_eiconv_spgrad(h_feat, e_feat, rain0, adj_xx, adj_yy,
                               w_xx, w_yy, params, tm=128)
    jax.block_until_ready((rain, h))

    # Pure-JAX f32 reference (kernel uses int8/bf16 on the N x N operands, so
    # compare with a relative-L2 tolerance).
    x_cat = jnp.concatenate([h_feat, e_feat], axis=1)
    e_mul_h = x_cat @ params['transform_h']
    h_ref = (adj_xx + adj_yy) @ e_mul_h
    grad_x = w_xx @ e_feat - jnp.sum(w_xx, 1, keepdims=True) * e_feat
    grad_y = w_yy @ e_feat - jnp.sum(w_yy, 1, keepdims=True) * e_feat
    h_cat = jnp.concatenate([h_ref, grad_x, grad_y], axis=1)
    rain_ref = (rain0.reshape(-1, 1)
                + (h_cat @ params['rainfall_in']) @ params['rainfall_out'])

    def relerr(a, b):
        return float(jnp.linalg.norm(a - b) / (jnp.linalg.norm(b) + 1e-12))

    assert relerr(h, h_ref) < 2e-2, "h mismatch"
    assert relerr(rain, rain_ref) < 2e-2, "rainfall mismatch"
    print("KERNEL_OK")
</pallas_src>

<mosaic_0001>
module attributes {stable_mosaic.version = 11 : i64} {
  func.func @_st_eiconv_kernel(%arg0: i32, %arg1: memref<128x256xi8, #tpu.memory_space<vmem>>, %arg2: memref<128x256xi8, #tpu.memory_space<vmem>>, %arg3: memref<128x256xbf16, #tpu.memory_space<vmem>>, %arg4: memref<128x256xbf16, #tpu.memory_space<vmem>>, %arg5: memref<256x9xbf16, #tpu.memory_space<vmem>>, %arg6: memref<256x2xbf16, #tpu.memory_space<vmem>>, %arg7: memref<256x2xbf16, #tpu.memory_space<vmem>>, %arg8: memref<128x3xf32, #tpu.memory_space<vmem>>, %arg9: memref<128x9xf32, #tpu.memory_space<vmem>>) attributes {dimension_semantics = [#tpu.dimension_semantics<parallel>], iteration_bounds = array<i64: 2>, scalar_prefetch = 0 : i64, scratch_operands = 0 : i64, tpu.core_type = #tpu.core_type<tc>, window_params = [{transform_indices = @transform_0, window_bounds = array<i64: 128, 256>}, {transform_indices = @transform_1, window_bounds = array<i64: 128, 256>}, {transform_indices = @transform_2, window_bounds = array<i64: 128, 256>}, {transform_indices = @transform_3, window_bounds = array<i64: 128, 256>}, {pipeline_mode = #tpu.pipeline_mode<synchronous>, transform_indices = @transform_4, window_bounds = array<i64: 256, 9>}, {pipeline_mode = #tpu.pipeline_mode<synchronous>, transform_indices = @transform_5, window_bounds = array<i64: 256, 2>}, {pipeline_mode = #tpu.pipeline_mode<synchronous>, transform_indices = @transform_6, window_bounds = array<i64: 256, 2>}, {transform_indices = @transform_7, window_bounds = array<i64: 128, 3>}, {transform_indices = @transform_8, window_bounds = array<i64: 128, 9>}]} {
    %c0 = arith.constant 0 : index
    %c0_0 = arith.constant 0 : index
    %0 = vector.load %arg1[%c0, %c0_0] : memref<128x256xi8, #tpu.memory_space<vmem>>, vector<128x256xi8>
    %1 = arith.sitofp %0 : vector<128x256xi8> to vector<128x256xbf16>
    %c0_1 = arith.constant 0 : index
    %c0_2 = arith.constant 0 : index
    %2 = vector.load %arg2[%c0_1, %c0_2] : memref<128x256xi8, #tpu.memory_space<vmem>>, vector<128x256xi8>
    %3 = arith.sitofp %2 : vector<128x256xi8> to vector<128x256xbf16>
    %c0_3 = arith.constant 0 : index
    %c0_4 = arith.constant 0 : index
    %4 = vector.load %arg5[%c0_3, %c0_4] : memref<256x9xbf16, #tpu.memory_space<vmem>>, vector<256x9xbf16>
    %cst = arith.constant dense<0.000000e+00> : vector<128x9xf32>
    %5 = tpu.matmul %1, %4, %cst {dimension_numbers = #tpu.dot_dimension_numbers<[1], [0], [0], [1], [0, 0, 1, 1], [], []>} : vector<128x256xbf16>, vector<256x9xbf16>, vector<128x9xf32> -> vector<128x9xf32>
    %cst_5 = arith.constant dense<0.000000e+00> : vector<128x9xf32>
    %6 = tpu.matmul %3, %4, %cst_5 {dimension_numbers = #tpu.dot_dimension_numbers<[1], [0], [0], [1], [0, 0, 1, 1], [], []>} : vector<128x256xbf16>, vector<256x9xbf16>, vector<128x9xf32> -> vector<128x9xf32>
    %7 = arith.addf %5, %6 : vector<128x9xf32>
    %c0_6 = arith.constant 0 : index
    %c0_7 = arith.constant 0 : index
    %8 = vector.load %arg3[%c0_6, %c0_7] : memref<128x256xbf16, #tpu.memory_space<vmem>>, vector<128x256xbf16>
    %c0_8 = arith.constant 0 : index
    %c0_9 = arith.constant 0 : index
    %9 = vector.load %arg6[%c0_8, %c0_9] : memref<256x2xbf16, #tpu.memory_space<vmem>>, vector<256x2xbf16>
    %cst_10 = arith.constant dense<0.000000e+00> : vector<128x2xf32>
    %10 = tpu.matmul %8, %9, %cst_10 {dimension_numbers = #tpu.dot_dimension_numbers<[1], [0], [0], [1], [0, 0, 1, 1], [], []>} : vector<128x256xbf16>, vector<256x2xbf16>, vector<128x2xf32> -> vector<128x2xf32>
    %c0_11 = arith.constant 0 : index
    %c0_12 = arith.constant 0 : index
    %11 = vector.load %arg4[%c0_11, %c0_12] : memref<128x256xbf16, #tpu.memory_space<vmem>>, vector<128x256xbf16>
    %c0_13 = arith.constant 0 : index
    %c0_14 = arith.constant 0 : index
    %12 = vector.load %arg7[%c0_13, %c0_14] : memref<256x2xbf16, #tpu.memory_space<vmem>>, vector<256x2xbf16>
    %cst_15 = arith.constant dense<0.000000e+00> : vector<128x2xf32>
    %13 = tpu.matmul %11, %12, %cst_15 {dimension_numbers = #tpu.dot_dimension_numbers<[1], [0], [0], [1], [0, 0, 1, 1], [], []>} : vector<128x256xbf16>, vector<256x2xbf16>, vector<128x2xf32> -> vector<128x2xf32>
    %c0_16 = arith.constant 0 : index
    %c0_17 = arith.constant 0 : index
    %14 = vector.load %arg8[%c0_16, %c0_17] : memref<128x3xf32, #tpu.memory_space<vmem>>, vector<128x3xf32>
    %15 = vector.extract_strided_slice %7 {offsets = [0, 0], sizes = [128, 8], strides = [1, 1]} : vector<128x9xf32> to vector<128x8xf32>
    %16 = vector.extract_strided_slice %7 {offsets = [0, 8], sizes = [128, 1], strides = [1, 1]} : vector<128x9xf32> to vector<128x1xf32>
    %17 = vector.extract_strided_slice %10 {offsets = [0, 0], sizes = [128, 1], strides = [1, 1]} : vector<128x2xf32> to vector<128x1xf32>
    %18 = arith.addf %16, %17 : vector<128x1xf32>
    %19 = vector.extract_strided_slice %10 {offsets = [0, 1], sizes = [128, 1], strides = [1, 1]} : vector<128x2xf32> to vector<128x1xf32>
    %20 = vector.extract_strided_slice %14 {offsets = [0, 0], sizes = [128, 1], strides = [1, 1]} : vector<128x3xf32> to vector<128x1xf32>
    %21 = arith.mulf %19, %20 : vector<128x1xf32>
    %22 = arith.subf %18, %21 : vector<128x1xf32>
    %23 = vector.extract_strided_slice %13 {offsets = [0, 0], sizes = [128, 1], strides = [1, 1]} : vector<128x2xf32> to vector<128x1xf32>
    %24 = arith.addf %22, %23 : vector<128x1xf32>
    %25 = vector.extract_strided_slice %13 {offsets = [0, 1], sizes = [128, 1], strides = [1, 1]} : vector<128x2xf32> to vector<128x1xf32>
    %26 = vector.extract_strided_slice %14 {offsets = [0, 1], sizes = [128, 1], strides = [1, 1]} : vector<128x3xf32> to vector<128x1xf32>
    %27 = arith.mulf %25, %26 : vector<128x1xf32>
    %28 = arith.subf %24, %27 : vector<128x1xf32>
    %29 = vector.extract_strided_slice %14 {offsets = [0, 2], sizes = [128, 1], strides = [1, 1]} : vector<128x3xf32> to vector<128x1xf32>
    %30 = arith.addf %28, %29 : vector<128x1xf32>
    %c0_18 = arith.constant 0 : index
    %c0_19 = arith.constant 0 : index
    %31 = vector.load %arg9[%c0_18, %c0_19] : memref<128x9xf32, #tpu.memory_space<vmem>>, vector<128x8xf32>
    tpu.vector_store %arg9[%c0_18, %c0_19], %15 {strides = array<i32>} : memref<128x9xf32, #tpu.memory_space<vmem>>, vector<128x8xf32>,
    %c0_20 = arith.constant 0 : index
    %c8 = arith.constant 8 : index
    %32 = vector.load %arg9[%c0_20, %c8] : memref<128x9xf32, #tpu.memory_space<vmem>>, vector<128x1xf32>
    tpu.vector_store %arg9[%c0_20, %c8], %30 {strides = array<i32>} : memref<128x9xf32, #tpu.memory_space<vmem>>, vector<128x1xf32>,
    return
  }
  func.func @transform_0(%arg0: i32) -> (i32, i32) {
    %c0_i32 = arith.constant 0 : i32
    %c0_i32_0 = arith.constant 0 : i32
    return %arg0, %c0_i32 : i32, i32
  }
  func.func @transform_1(%arg0: i32) -> (i32, i32) {
    %c0_i32 = arith.constant 0 : i32
    %c0_i32_0 = arith.constant 0 : i32
    return %arg0, %c0_i32 : i32, i32
  }
  func.func @transform_2(%arg0: i32) -> (i32, i32) {
    %c0_i32 = arith.constant 0 : i32
    %c0_i32_0 = arith.constant 0 : i32
    return %arg0, %c0_i32 : i32, i32
  }
  func.func @transform_3(%arg0: i32) -> (i32, i32) {
    %c0_i32 = arith.constant 0 : i32
    %c0_i32_0 = arith.constant 0 : i32
    return %arg0, %c0_i32 : i32, i32
  }
  func.func @transform_4(%arg0: i32) -> (i32, i32) {
    %c0_i32 = arith.constant 0 : i32
    %c0_i32_0 = arith.constant 0 : i32
    %c0_i32_1 = arith.constant 0 : i32
    return %c0_i32, %c0_i32_0 : i32, i32
  }
  func.func @transform_5(%arg0: i32) -> (i32, i32) {
    %c0_i32 = arith.constant 0 : i32
    %c0_i32_0 = arith.constant 0 : i32
    %c0_i32_1 = arith.constant 0 : i32
    return %c0_i32, %c0_i32_0 : i32, i32
  }
  func.func @transform_6(%arg0: i32) -> (i32, i32) {
    %c0_i32 = arith.constant 0 : i32
    %c0_i32_0 = arith.constant 0 : i32
    %c0_i32_1 = arith.constant 0 : i32
    return %c0_i32, %c0_i32_0 : i32, i32
  }
  func.func @transform_7(%arg0: i32) -> (i32, i32) {
    %c0_i32 = arith.constant 0 : i32
    %c0_i32_0 = arith.constant 0 : i32
    return %arg0, %c0_i32 : i32, i32
  }
  func.func @transform_8(%arg0: i32) -> (i32, i32) {
    %c0_i32 = arith.constant 0 : i32
    %c0_i32_0 = arith.constant 0 : i32
    return %arg0, %c0_i32 : i32, i32
  }
}

</mosaic_0001>

<llo_original>
// kernel: tpu_custom_call.1
$region0: #{tpu_custom_call.1}
  #allocation0 [shape = 'u32[]', space=smem, size = 0x4, offset = 0x4, fixed_abs, tag = 'smem constant byte address 0x4 - core index']
  #allocation1 [shape = 'u32[72,128]{1,0:T(1,128)}', space=vmem, size = 0x9000, scoped, tag = 'internal scratch']
  %s0 = inlined_call_operand.vmem [shape: s8[256,256], index: 0, kind: input, shape index: {}]
  %s1 = inlined_call_operand.hbm [shape: s8[256,256], index: 1, kind: input, shape index: {}]
  %s2 = inlined_call_operand.vmem [shape: bf16[256,256], index: 2, kind: input, shape index: {}]
  %s3 = inlined_call_operand.vmem [shape: bf16[256,256], index: 3, kind: input, shape index: {}]
  %s4 = inlined_call_operand.vmem [shape: bf16[256,9], index: 4, kind: input, shape index: {}]
  %s5 = inlined_call_operand.vmem [shape: bf16[256,2], index: 5, kind: input, shape index: {}]
  %s6 = inlined_call_operand.vmem [shape: bf16[256,2], index: 6, kind: input, shape index: {}]
  %s7 = inlined_call_operand.vmem [shape: f32[256,3], index: 7, kind: input, shape index: {}]
  %s8 = inlined_call_operand.vmem [shape: f32[256,9], index: 8, kind: output, shape index: {}]
  %s9 = sld [smem:[#allocation0]]
  $region69: #{tpu_custom_call.1} parent=0
    _
  %s11 = ssub.s32 1, %s9
  %s12 = scalar_select 0, %s11, %s9
  $region1: #{tpu_custom_call.1} parent=0
    #allocation2 [shape = 'u8[65536]{0}', space=vmem, size = 0x10000, scoped, tag = 'input window, operand 1']
    #allocation3 [shape = 's32[2]{0}', space=sflag, size = 0x8, scoped, tag = 'scoped memory for tpu_custom_call.1']
    %13 = vsyncpa [#allocation3], 0
    %s14 = scalar_lea.sflag [#allocation3], 1
    %15 = vsyncpa %s14, 0
    loop: start=0, step=1, limit=4
    $region2: #{tpu_custom_call.1} parent=1 // loop_pre_header
      _
    $region3: #{tpu_custom_call.1} parent=1 // loop_header
      %s17 = sphi 0, %s21
      %p18 = scmp.ge.s32.totalorder %s17, 4
      %s27 = sphi 0, %s29
      %s30 = sphi 0, %s27
      %s31 = sphi 0, %s30
      %s47 = sphi 0, %s31
      %s53 = sphi 0, %s55
      %s56 = sphi 0, %s53
      %s57 = sphi 0, %s56
      %s73 = sphi 0, %s57
      %s79 = sphi 0, %s81
      %s82 = sphi 0, %s79
      %s83 = sphi 0, %s82
      %s99 = sphi 0, %s83
      %s105 = sphi 0, %s107
      %s108 = sphi 0, %s105
      %s109 = sphi 0, %s108
      %s125 = sphi 0, %s109
      %s129 = sphi 0, %s129
      %s131 = sphi 0, %s129
      %s132 = sphi 0, %s131
      %s146 = sphi 0, %s132
      %s150 = sphi 0, %s150
      %s152 = sphi 0, %s150
      %s153 = sphi 0, %s152
      %s167 = sphi 0, %s153
      %s171 = sphi 0, %s171
      %s173 = sphi 0, %s171
      %s174 = sphi 0, %s173
      %s188 = sphi 0, %s174
      %s194 = sphi 0, %s196
      %s197 = sphi 0, %s194
      %s198 = sphi 0, %s197
      %s214 = sphi 0, %s198
      %s220 = sphi 0, %s222
      %s223 = sphi 0, %s220
      %s224 = sphi 0, %s223
      %s240 = sphi 0, %s224
    $region4: #{tpu_custom_call.1} parent=1 // loop_header_branch
      %20 = sbr.rel (%p18) target = $region8
    $region5: #{tpu_custom_call.1} parent=1 // loop_body
      %s22 = ssub.s32 %s17, 1
      %s23 = ssub.s32 %s17, 2
      %s24 = sadd.s32 %s17, 1
      %s25 = ssub.s32 %s17, %s24
      %p26 = scmp.eq.s32.totalorder %s25, 0
      %s28 = sadd.s32 %s27, 1
      %s29 = scalar_select %p26, %s27, %s28
      %p32 = pneg %p26
      %p33 = scmp.eq.s32.totalorder %s17, 1
      %p34 = por %p32, %p33
      %p35 = scmp.ne.s32.totalorder %s27, %s30
      %p36 = scmp.eq.s32.totalorder %s17, 0
      %p37 = por %p35, %p36
      %p38 = scmp.ne.s32.totalorder %s27, %s30
      %p39 = scmp.eq.s32.totalorder %s22, 1
      %p40 = por %p38, %p39
      %p41 = scmp.ne.s32.totalorder %s30, %s31
      %p42 = scmp.eq.s32.totalorder %s22, 0
      %p43 = por %p41, %p42
      %p44 = scmp.ne.s32.totalorder %s30, %s31
      %p45 = scmp.eq.s32.totalorder %s23, 1
      %p46 = por %p44, %p45
      %p48 = scmp.ne.s32.totalorder %s31, %s47
      %p49 = scmp.eq.s32.totalorder %s23, 0
      %p50 = por %p48, %p49
      %s51 = ssub.s32 %s17, %s24
      %p52 = scmp.eq.s32.totalorder %s51, 0
      %s54 = sadd.s32 %s53, 1
      %s55 = scalar_select %p52, %s53, %s54
      %p58 = pneg %p52
      %p59 = scmp.eq.s32.totalorder %s17, 1
      %p60 = por %p58, %p59
      %p61 = scmp.ne.s32.totalorder %s53, %s56
      %p62 = scmp.eq.s32.totalorder %s17, 0
      %p63 = por %p61, %p62
      %p64 = scmp.ne.s32.totalorder %s53, %s56
      %p65 = scmp.eq.s32.totalorder %s22, 1
      %p66 = por %p64, %p65
      %p67 = scmp.ne.s32.totalorder %s56, %s57
      %p68 = scmp.eq.s32.totalorder %s22, 0
      %p69 = por %p67, %p68
      %p70 = scmp.ne.s32.totalorder %s56, %s57
      %p71 = scmp.eq.s32.totalorder %s23, 1
      %p72 = por %p70, %p71
      %p74 = scmp.ne.s32.totalorder %s57, %s73
      %p75 = scmp.eq.s32.totalorder %s23, 0
      %p76 = por %p74, %p75
      %s77 = ssub.s32 %s17, %s24
      %p78 = scmp.eq.s32.totalorder %s77, 0
      %s80 = sadd.s32 %s79, 1
      %s81 = scalar_select %p78, %s79, %s80
      %p84 = pneg %p78
      %p85 = scmp.eq.s32.totalorder %s17, 1
      %p86 = por %p84, %p85
      %p87 = scmp.ne.s32.totalorder %s79, %s82
      %p88 = scmp.eq.s32.totalorder %s17, 0
      %p89 = por %p87, %p88
      %p90 = scmp.ne.s32.totalorder %s79, %s82
      %p91 = scmp.eq.s32.totalorder %s22, 1
      %p92 = por %p90, %p91
      %p93 = scmp.ne.s32.totalorder %s82, %s83
      %p94 = scmp.eq.s32.totalorder %s22, 0
      %p95 = por %p93, %p94
      %p96 = scmp.ne.s32.totalorder %s82, %s83
      %p97 = scmp.eq.s32.totalorder %s23, 1
      %p98 = por %p96, %p97
      %p100 = scmp.ne.s32.totalorder %s83, %s99
      %p101 = scmp.eq.s32.totalorder %s23, 0
      %p102 = por %p100, %p101
      %s103 = ssub.s32 %s17, %s24
      %p104 = scmp.eq.s32.totalorder %s103, 0
      %s106 = sadd.s32 %s105, 1
      %s107 = scalar_select %p104, %s105, %s106
      %p110 = pneg %p104
      %p111 = scmp.eq.s32.totalorder %s17, 1
      %p112 = por %p110, %p111
      %p113 = scmp.ne.s32.totalorder %s105, %s108
      %p114 = scmp.eq.s32.totalorder %s17, 0
      %p115 = por %p113, %p114
      %p116 = scmp.ne.s32.totalorder %s105, %s108
      %p117 = scmp.eq.s32.totalorder %s22, 1
      %p118 = por %p116, %p117
      %p119 = scmp.ne.s32.totalorder %s108, %s109
      %p120 = scmp.eq.s32.totalorder %s22, 0
      %p121 = por %p119, %p120
      %p122 = scmp.ne.s32.totalorder %s108, %s109
      %p123 = scmp.eq.s32.totalorder %s23, 1
      %p124 = por %p122, %p123
      %p126 = scmp.ne.s32.totalorder %s109, %s125
      %p127 = scmp.eq.s32.totalorder %s23, 0
      %p128 = por %p126, %p127
      %s130 = sadd.s32 %s129, 1
      %p133 = scmp.eq.s32.totalorder %s17, 1
      %p134 = scmp.ne.s32.totalorder %s129, %s131
      %p135 = scmp.eq.s32.totalorder %s17, 0
      %p136 = por %p134, %p135
      %p137 = scmp.ne.s32.totalorder %s129, %s131
      %p138 = scmp.eq.s32.totalorder %s22, 1
      %p139 = por %p137, %p138
      %p140 = scmp.ne.s32.totalorder %s131, %s132
      %p141 = scmp.eq.s32.totalorder %s22, 0
      %p142 = por %p140, %p141
      %p143 = scmp.ne.s32.totalorder %s131, %s132
      %p144 = scmp.eq.s32.totalorder %s23, 1
      %p145 = por %p143, %p144
      %p147 = scmp.ne.s32.totalorder %s132, %s146
      %p148 = scmp.eq.s32.totalorder %s23, 0
      %p149 = por %p147, %p148
      %s151 = sadd.s32 %s150, 1
      %p154 = scmp.eq.s32.totalorder %s17, 1
      %p155 = scmp.ne.s32.totalorder %s150, %s152
      %p156 = scmp.eq.s32.totalorder %s17, 0
      %p157 = por %p155, %p156
      %p158 = scmp.ne.s32.totalorder %s150, %s152
      %p159 = scmp.eq.s32.totalorder %s22, 1
      %p160 = por %p158, %p159
      %p161 = scmp.ne.s32.totalorder %s152, %s153
      %p162 = scmp.eq.s32.totalorder %s22, 0
      %p163 = por %p161, %p162
      %p164 = scmp.ne.s32.totalorder %s152, %s153
      %p165 = scmp.eq.s32.totalorder %s23, 1
      %p166 = por %p164, %p165
      %p168 = scmp.ne.s32.totalorder %s153, %s167
      %p169 = scmp.eq.s32.totalorder %s23, 0
      %p170 = por %p168, %p169
      %s172 = sadd.s32 %s171, 1
      %p175 = scmp.eq.s32.totalorder %s17, 1
      %p176 = scmp.ne.s32.totalorder %s171, %s173
      %p177 = scmp.eq.s32.totalorder %s17, 0
      %p178 = por %p176, %p177
      %p179 = scmp.ne.s32.totalorder %s171, %s173
      %p180 = scmp.eq.s32.totalorder %s22, 1
      %p181 = por %p179, %p180
      %p182 = scmp.ne.s32.totalorder %s173, %s174
      %p183 = scmp.eq.s32.totalorder %s22, 0
      %p184 = por %p182, %p183
      %p185 = scmp.ne.s32.totalorder %s173, %s174
      %p186 = scmp.eq.s32.totalorder %s23, 1
      %p187 = por %p185, %p186
      %p189 = scmp.ne.s32.totalorder %s174, %s188
      %p190 = scmp.eq.s32.totalorder %s23, 0
      %p191 = por %p189, %p190
      %s192 = ssub.s32 %s17, %s24
      %p193 = scmp.eq.s32.totalorder %s192, 0
      %s195 = sadd.s32 %s194, 1
      %s196 = scalar_select %p193, %s194, %s195
      %p199 = pneg %p193
      %p200 = scmp.eq.s32.totalorder %s17, 1
      %p201 = por %p199, %p200
      %p202 = scmp.ne.s32.totalorder %s194, %s197
      %p203 = scmp.eq.s32.totalorder %s17, 0
      %p204 = por %p202, %p203
      %p205 = scmp.ne.s32.totalorder %s194, %s197
      %p206 = scmp.eq.s32.totalorder %s22, 1
      %p207 = por %p205, %p206
      %p208 = scmp.ne.s32.totalorder %s197, %s198
      %p209 = scmp.eq.s32.totalorder %s22, 0
      %p210 = por %p208, %p209
      %p211 = scmp.ne.s32.totalorder %s197, %s198
      %p212 = scmp.eq.s32.totalorder %s23, 1
      %p213 = por %p211, %p212
      %p215 = scmp.ne.s32.totalorder %s198, %s214
      %p216 = scmp.eq.s32.totalorder %s23, 0
      %p217 = por %p215, %p216
      %s218 = ssub.s32 %s17, %s24
      %p219 = scmp.eq.s32.totalorder %s218, 0
      %s221 = sadd.s32 %s220, 1
      %s222 = scalar_select %p219, %s220, %s221
      %p225 = pneg %p219
      %p226 = scmp.eq.s32.totalorder %s17, 1
      %p227 = por %p225, %p226
      %p228 = scmp.ne.s32.totalorder %s220, %s223
      %p229 = scmp.eq.s32.totalorder %s17, 0
      %p230 = por %p228, %p229
      %p231 = scmp.ne.s32.totalorder %s220, %s223
      %p232 = scmp.eq.s32.totalorder %s22, 1
      %p233 = por %p231, %p232
      %p234 = scmp.ne.s32.totalorder %s223, %s224
      %p235 = scmp.eq.s32.totalorder %s22, 0
      %p236 = por %p234, %p235
      %p237 = scmp.ne.s32.totalorder %s223, %s224
      %p238 = scmp.eq.s32.totalorder %s23, 1
      %p239 = por %p237, %p238
      %p241 = scmp.ne.s32.totalorder %s224, %s240
      %p242 = scmp.eq.s32.totalorder %s23, 0
      %p243 = por %p241, %p242
      %p244 = scmp.le.s32.totalorder 1, %s17
      %p245 = scmp.lt.s32.totalorder %s17, 3
      %p246 = pnand %p244, %p245
      %p247 = pneg %p246
      // Predicated region
      $region9: #{tpu_custom_call.1} parent=5 // pred_check
        _
      $region10: #{tpu_custom_call.1} parent=5 // pred_check_branch
        %249 = sbr.rel (%p246) target = $region12
      $region11: #{tpu_custom_call.1} parent=5 // pred_region
        %s250 = ssub.s32 %s17, 1
        // Predicated region
        $region13: #{tpu_custom_call.1} parent=11 // pred_check
          %p251 = pneg %p142
        $region14: #{tpu_custom_call.1} parent=11 // pred_check_branch
          %253 = sbr.rel (%p251) target = $region16
        $region15: #{tpu_custom_call.1} parent=11 // pred_region
          _
        $region16: #{tpu_custom_call.1} parent=11 // pred_fallthru
          _
        // Predicated region
        $region17: #{tpu_custom_call.1} parent=11 // pred_check
          %p254 = pneg %p163
        $region18: #{tpu_custom_call.1} parent=11 // pred_check_branch
          %256 = sbr.rel (%p254) target = $region20
        $region19: #{tpu_custom_call.1} parent=11 // pred_region
          _
        $region20: #{tpu_custom_call.1} parent=11 // pred_fallthru
          _
        // Predicated region
        $region21: #{tpu_custom_call.1} parent=11 // pred_check
          %p257 = pneg %p184
        $region22: #{tpu_custom_call.1} parent=11 // pred_check_branch
          %259 = sbr.rel (%p257) target = $region24
        $region23: #{tpu_custom_call.1} parent=11 // pred_region
          _
        $region24: #{tpu_custom_call.1} parent=11 // pred_fallthru
          _
      $region12: #{tpu_custom_call.1} parent=5 // pred_fallthru
        _
      %p260 = scmp.lt.s32.totalorder %s17, 2
      // Predicated region
      $region25: #{tpu_custom_call.1} parent=5 // pred_check
        %p261 = pneg %p260
      $region26: #{tpu_custom_call.1} parent=5 // pred_check_branch
        %263 = sbr.rel (%p261) target = $region28
      $region27: #{tpu_custom_call.1} parent=5 // pred_region
        // Predicated region
        $region29: #{tpu_custom_call.1} parent=27 // pred_check
          %p264 = pneg %p37
        $region30: #{tpu_custom_call.1} parent=27 // pred_check_branch
          %266 = sbr.rel (%p264) target = $region32
        $region31: #{tpu_custom_call.1} parent=27 // pred_region
          %s267 = smul.u32 4, %s17
          %p268 = scmp.lt.s32.totalorder %s267, 7
          %s269 = scalar_select %p268, %s267, 7
          %s270 = smul.addr %s269, 2
          %s271 = smul.addr %s270, 8
          %s272 = scalar_lea.vmem %s0, %s271
          %s273 = smul.u32 4, %s17
        $region32: #{tpu_custom_call.1} parent=27 // pred_fallthru
          _
        // Predicated region
        $region33: #{tpu_custom_call.1} parent=27 // pred_check
          %p274 = pneg %p63
        $region34: #{tpu_custom_call.1} parent=27 // pred_check_branch
          %276 = sbr.rel (%p274) target = $region36
        $region35: #{tpu_custom_call.1} parent=27 // pred_region
          %s277 = sand.u32 %s53, 1
          %s278 = scalar_lea.sflag [#allocation3], %s277
          %s279 = sand.u32 %s53, 1
          %s280 = smul.addr %s279, 64
          %s281 = scalar_lea.vmem [#allocation2], %s280
          %s282 = smul.u32 4, %s17
          %284 = vsyncadd %s278, 0
          %s285 = smul.addr %s282, 2
          %s286 = smul.addr %s285, 8
          %s287 = scalar_lea.hbm %s1, %s286
          %s288 = sshll.u32 %s287, 4
          %s289 = int_to_ptr.hbm [resolvable:$true] %s288
          %s290 = sshll.u32 %s281, 4
          %s291 = int_to_ptr.vmem [resolvable:$true] %s290
          %296 = dma.hbm_to_vmem [thread:$0]  %s289, 1024, %s291, %s278, 256, 256, 16
        $region36: #{tpu_custom_call.1} parent=27 // pred_fallthru
          _
        // Predicated region
        $region37: #{tpu_custom_call.1} parent=27 // pred_check
          %p297 = pneg %p89
        $region38: #{tpu_custom_call.1} parent=27 // pred_check_branch
          %299 = sbr.rel (%p297) target = $region40
        $region39: #{tpu_custom_call.1} parent=27 // pred_region
          %s300 = smul.u32 16, %s17
          %p301 = scmp.lt.s32.totalorder %s300, 31
          %s302 = scalar_select %p301, %s300, 31
          %s303 = smul.addr %s302, 2
          %s304 = smul.addr %s303, 4
          %s305 = scalar_lea.vmem %s2, %s304
          %s306 = smul.u32 16, %s17
        $region40: #{tpu_custom_call.1} parent=27 // pred_fallthru
          _
        // Predicated region
        $region41: #{tpu_custom_call.1} parent=27 // pred_check
          %p307 = pneg %p115
        $region42: #{tpu_custom_call.1} parent=27 // pred_check_branch
          %309 = sbr.rel (%p307) target = $region44
        $region43: #{tpu_custom_call.1} parent=27 // pred_region
          %s310 = smul.u32 16, %s17
          %p311 = scmp.lt.s32.totalorder %s310, 31
          %s312 = scalar_select %p311, %s310, 31
          %s313 = smul.addr %s312, 2
          %s314 = smul.addr %s313, 4
          %s315 = scalar_lea.vmem %s3, %s314
          %s316 = smul.u32 16, %s17
        $region44: #{tpu_custom_call.1} parent=27 // pred_fallthru
          _
        // Predicated region
        $region45: #{tpu_custom_call.1} parent=27 // pred_check
          %p317 = pneg %p204
        $region46: #{tpu_custom_call.1} parent=27 // pred_check_branch
          %319 = sbr.rel (%p317) target = $region48
        $region47: #{tpu_custom_call.1} parent=27 // pred_region
          %s320 = smul.u32 16, %s17
          %p321 = scmp.lt.s32.totalorder %s320, 31
          %s322 = scalar_select %p321, %s320, 31
          %s323 = smul.addr %s322, 8
          %s324 = scalar_lea.vmem %s7, %s323
          %s325 = smul.u32 16, %s17
        $region48: #{tpu_custom_call.1} parent=27 // pred_fallthru
          _
      $region28: #{tpu_custom_call.1} parent=5 // pred_fallthru
        _
      %p326 = scmp.le.s32.totalorder 1, %s17
      %p327 = scmp.lt.s32.totalorder %s17, 3
      %p328 = pnand %p326, %p327
      %p329 = pneg %p328
      // Predicated region
      $region49: #{tpu_custom_call.1} parent=5 // pred_check
        _
      $region50: #{tpu_custom_call.1} parent=5 // pred_check_branch
        %331 = sbr.rel (%p328) target = $region52
      $region51: #{tpu_custom_call.1} parent=5 // pred_region
        %s332 = ssub.s32 %s17, 1
        %s333 = sand.u32 %s56, 1
        %s334 = scalar_lea.sflag [#allocation3], %s333
        %s335 = sand.u32 %s56, 1
        %s336 = smul.addr %s335, 64
        %s337 = scalar_lea.vmem [#allocation2], %s336
        // Predicated region
        $region53: #{tpu_custom_call.1} parent=51 // pred_check
          %p338 = pneg %p69
        $region54: #{tpu_custom_call.1} parent=51 // pred_check_branch
          %340 = sbr.rel (%p338) target = $region56
        $region55: #{tpu_custom_call.1} parent=51 // pred_region
          %342 = dma.done %s334, 1024
        $region56: #{tpu_custom_call.1} parent=51 // pred_fallthru
          _
        %s343 = smul.u32 4, %s22
        %p344 = scmp.lt.s32.totalorder %s343, 7
        %s345 = scalar_select %p344, %s343, 7
        %s346 = smul.addr %s345, 2
        %s347 = smul.addr %s346, 8
        %s348 = scalar_lea.vmem %s0, %s347
        %p349 = pneg %p43
        %p350 = pneg %p40
        %s351 = sand.u32 %s56, 1
        %s352 = scalar_lea.sflag [#allocation3], %s351
        %s353 = sand.u32 %s56, 1
        %s354 = smul.addr %s353, 64
        %s355 = scalar_lea.vmem [#allocation2], %s354
        %p356 = pneg %p69
        %p357 = pneg %p66
        %s358 = smul.u32 16, %s22
        %p359 = scmp.lt.s32.totalorder %s358, 31
        %s360 = scalar_select %p359, %s358, 31
        %s361 = smul.addr %s360, 2
        %s362 = smul.addr %s361, 4
        %s363 = scalar_lea.vmem %s2, %s362
        %p364 = pneg %p95
        %p365 = pneg %p92
        %s366 = smul.u32 16, %s22
        %p367 = scmp.lt.s32.totalorder %s366, 31
        %s368 = scalar_select %p367, %s366, 31
        %s369 = smul.addr %s368, 2
        %s370 = smul.addr %s369, 4
        %s371 = scalar_lea.vmem %s3, %s370
        %p372 = pneg %p121
        %p373 = pneg %p118
        %p374 = pneg %p142
        %p375 = pneg %p139
        %p376 = pneg %p163
        %p377 = pneg %p160
        %p378 = pneg %p184
        %p379 = pneg %p181
        %s380 = smul.u32 16, %s22
        %p381 = scmp.lt.s32.totalorder %s380, 31
        %s382 = scalar_select %p381, %s380, 31
        %s383 = smul.addr %s382, 8
        %s384 = scalar_lea.vmem %s7, %s383
        %p385 = pneg %p210
        %p386 = pneg %p207
        %p387 = pneg %p236
        %p388 = pneg %p233
        %s389 = smul.u32 16, %s22
        %p390 = scmp.lt.s32.totalorder %s389, 31
        %s391 = scalar_select %p390, %s389, 31
        %s392 = smul.addr %s391, 8
        %s393 = scalar_lea.vmem %s8, %s392
        %s394 = smul.u32 4, %s22
        %p395 = scmp.lt.s32.totalorder %s394, 7
        %s396 = scalar_select %p395, %s394, 7
        %s397 = smul.addr %s396, 2
        %s398 = smul.addr %s397, 8
        %s399 = scalar_lea.vmem %s0, %s398
        %s400 = smul.u32 4, %s22
        %s401 = smul.u32 4, %s22
        %s402 = smul.u32 16, %s22
        %p403 = scmp.lt.s32.totalorder %s402, 31
        %s404 = scalar_select %p403, %s402, 31
        %s405 = smul.addr %s404, 2
        %s406 = smul.addr %s405, 4
        %s407 = scalar_lea.vmem %s2, %s406
        %s408 = smul.u32 16, %s22
        %s409 = smul.u32 16, %s22
        %p410 = scmp.lt.s32.totalorder %s409, 31
        %s411 = scalar_select %p410, %s409, 31
        %s412 = smul.addr %s411, 2
        %s413 = smul.addr %s412, 4
        %s414 = scalar_lea.vmem %s3, %s413
        %s415 = smul.u32 16, %s22
        %s416 = smul.u32 16, %s22
        %p417 = scmp.lt.s32.totalorder %s416, 31
        %s418 = scalar_select %p417, %s416, 31
        %s419 = smul.addr %s418, 8
        %s420 = scalar_lea.vmem %s7, %s419
        %s421 = smul.u32 16, %s22
        %s422 = smul.u32 16, %s22
        %p423 = scmp.lt.s32.totalorder %s422, 31
        %s424 = scalar_select %p423, %s422, 31
        %s425 = smul.addr %s424, 8
        %s426 = scalar_lea.vmem %s8, %s425
        %s427 = smul.u32 16, %s22
        %v428 = vld [vmem:[%s399] sm:$0xff]
        %v429 = vld [vmem:[%s399 + $0x8] sm:$0xff]
        %v430 = vld [vmem:[%s399 + $0x10] sm:$0xff]
        %v431 = vld [vmem:[%s399 + $0x18] sm:$0xff]
        %v432 = vld [vmem:[%s399 + $0x20] sm:$0xff]
        %v433 = vld [vmem:[%s399 + $0x28] sm:$0xff]
        %v434 = vld [vmem:[%s399 + $0x30] sm:$0xff]
        %v435 = vld [vmem:[%s399 + $0x38] sm:$0xff]
        %v436 = vunpack.c.0.s8 %v428
        %v437 = vunpack.c.0.s8 %v429
        %v438 = vunpack.c.1.s8 %v428
        %v439 = vunpack.c.1.s8 %v429
        %v440 = vunpack.c.2.s8 %v428
        %v441 = vunpack.c.2.s8 %v429
        %v442 = vunpack.c.3.s8 %v428
        %v443 = vunpack.c.3.s8 %v429
        %v444 = vunpack.c.0.s8 %v430
        %v445 = vunpack.c.0.s8 %v431
        %v446 = vunpack.c.1.s8 %v430
        %v447 = vunpack.c.1.s8 %v431
        %v448 = vunpack.c.2.s8 %v430
        %v449 = vunpack.c.2.s8 %v431
        %v450 = vunpack.c.3.s8 %v430
        %v451 = vunpack.c.3.s8 %v431
        %v452 = vunpack.c.0.s8 %v432
        %v453 = vunpack.c.0.s8 %v433
        %v454 = vunpack.c.1.s8 %v432
        %v455 = vunpack.c.1.s8 %v433
        %v456 = vunpack.c.2.s8 %v432
        %v457 = vunpack.c.2.s8 %v433
        %v458 = vunpack.c.3.s8 %v432
        %v459 = vunpack.c.3.s8 %v433
        %v460 = vunpack.c.0.s8 %v434
        %v461 = vunpack.c.0.s8 %v435
        %v462 = vunpack.c.1.s8 %v434
        %v463 = vunpack.c.1.s8 %v435
        %v464 = vunpack.c.2.s8 %v434
        %v465 = vunpack.c.2.s8 %v435
        %v466 = vunpack.c.3.s8 %v434
        %v467 = vunpack.c.3.s8 %v435
        %v468 = vcvt.s32.f32 %v436
        %v469 = vcvt.s32.f32 %v437
        %v470 = vcvt.s32.f32 %v438
        %v471 = vcvt.s32.f32 %v439
        %v472 = vcvt.s32.f32 %v440
        %v473 = vcvt.s32.f32 %v441
        %v474 = vcvt.s32.f32 %v442
        %v475 = vcvt.s32.f32 %v443
        %v476 = vcvt.s32.f32 %v444
        %v477 = vcvt.s32.f32 %v445
        %v478 = vcvt.s32.f32 %v446
        %v479 = vcvt.s32.f32 %v447
        %v480 = vcvt.s32.f32 %v448
        %v481 = vcvt.s32.f32 %v449
        %v482 = vcvt.s32.f32 %v450
        %v483 = vcvt.s32.f32 %v451
        %v484 = vcvt.s32.f32 %v452
        %v485 = vcvt.s32.f32 %v453
        %v486 = vcvt.s32.f32 %v454
        %v487 = vcvt.s32.f32 %v455
        %v488 = vcvt.s32.f32 %v456
        %v489 = vcvt.s32.f32 %v457
        %v490 = vcvt.s32.f32 %v458
        %v491 = vcvt.s32.f32 %v459
        %v492 = vcvt.s32.f32 %v460
        %v493 = vcvt.s32.f32 %v461
        %v494 = vcvt.s32.f32 %v462
        %v495 = vcvt.s32.f32 %v463
        %v496 = vcvt.s32.f32 %v464
        %v497 = vcvt.s32.f32 %v465
        %v498 = vcvt.s32.f32 %v466
        %v499 = vcvt.s32.f32 %v467
        %v500 = vpack.c.bf16 %v470, %v468
        %v501 = vpack.c.bf16 %v471, %v469
        %v502 = vpack.c.bf16 %v474, %v472
        %v503 = vpack.c.bf16 %v475, %v473
        %v504 = vpack.c.bf16 %v478, %v476
        %v505 = vpack.c.bf16 %v479, %v477
        %v506 = vpack.c.bf16 %v482, %v480
        %v507 = vpack.c.bf16 %v483, %v481
        %v508 = vpack.c.bf16 %v486, %v484
        %v509 = vpack.c.bf16 %v487, %v485
        %v510 = vpack.c.bf16 %v490, %v488
        %v511 = vpack.c.bf16 %v491, %v489
        %v512 = vpack.c.bf16 %v494, %v492
        %v513 = vpack.c.bf16 %v495, %v493
        %v514 = vpack.c.bf16 %v498, %v496
        %v515 = vpack.c.bf16 %v499, %v497
        %v516 = vld [vmem:[%s337] sm:$0xff]
        %v517 = vld [vmem:[%s337 + $0x8] sm:$0xff]
        %v518 = vld [vmem:[%s337 + $0x10] sm:$0xff]
        %v519 = vld [vmem:[%s337 + $0x18] sm:$0xff]
        %v520 = vld [vmem:[%s337 + $0x20] sm:$0xff]
        %v521 = vld [vmem:[%s337 + $0x28] sm:$0xff]
        %v522 = vld [vmem:[%s337 + $0x30] sm:$0xff]
        %v523 = vld [vmem:[%s337 + $0x38] sm:$0xff]
        %v524 = vunpack.c.0.s8 %v516
        %v525 = vunpack.c.0.s8 %v517
        %v526 = vunpack.c.1.s8 %v516
        %v527 = vunpack.c.1.s8 %v517
        %v528 = vunpack.c.2.s8 %v516
        %v529 = vunpack.c.2.s8 %v517
        %v530 = vunpack.c.3.s8 %v516
        %v531 = vunpack.c.3.s8 %v517
        %v532 = vunpack.c.0.s8 %v518
        %v533 = vunpack.c.0.s8 %v519
        %v534 = vunpack.c.1.s8 %v518
        %v535 = vunpack.c.1.s8 %v519
        %v536 = vunpack.c.2.s8 %v518
        %v537 = vunpack.c.2.s8 %v519
        %v538 = vunpack.c.3.s8 %v518
        %v539 = vunpack.c.3.s8 %v519
        %v540 = vunpack.c.0.s8 %v520
        %v541 = vunpack.c.0.s8 %v521
        %v542 = vunpack.c.1.s8 %v520
        %v543 = vunpack.c.1.s8 %v521
        %v544 = vunpack.c.2.s8 %v520
        %v545 = vunpack.c.2.s8 %v521
        %v546 = vunpack.c.3.s8 %v520
        %v547 = vunpack.c.3.s8 %v521
        %v548 = vunpack.c.0.s8 %v522
        %v549 = vunpack.c.0.s8 %v523
        %v550 = vunpack.c.1.s8 %v522
        %v551 = vunpack.c.1.s8 %v523
        %v552 = vunpack.c.2.s8 %v522
        %v553 = vunpack.c.2.s8 %v523
        %v554 = vunpack.c.3.s8 %v522
        %v555 = vunpack.c.3.s8 %v523
        %v556 = vcvt.s32.f32 %v524
        %v557 = vcvt.s32.f32 %v525
        %v558 = vcvt.s32.f32 %v526
        %v559 = vcvt.s32.f32 %v527
        %v560 = vcvt.s32.f32 %v528
        %v561 = vcvt.s32.f32 %v529
        %v562 = vcvt.s32.f32 %v530
        %v563 = vcvt.s32.f32 %v531
        %v564 = vcvt.s32.f32 %v532
        %v565 = vcvt.s32.f32 %v533
        %v566 = vcvt.s32.f32 %v534
        %v567 = vcvt.s32.f32 %v535
        %v568 = vcvt.s32.f32 %v536
        %v569 = vcvt.s32.f32 %v537
        %v570 = vcvt.s32.f32 %v538
        %v571 = vcvt.s32.f32 %v539
        %v572 = vcvt.s32.f32 %v540
        %v573 = vcvt.s32.f32 %v541
        %v574 = vcvt.s32.f32 %v542
        %v575 = vcvt.s32.f32 %v543
        %v576 = vcvt.s32.f32 %v544
        %v577 = vcvt.s32.f32 %v545
        %v578 = vcvt.s32.f32 %v546
        %v579 = vcvt.s32.f32 %v547
        %v580 = vcvt.s32.f32 %v548
        %v581 = vcvt.s32.f32 %v549
        %v582 = vcvt.s32.f32 %v550
        %v583 = vcvt.s32.f32 %v551
        %v584 = vcvt.s32.f32 %v552
        %v585 = vcvt.s32.f32 %v553
        %v586 = vcvt.s32.f32 %v554
        %v587 = vcvt.s32.f32 %v555
        %v588 = vpack.c.bf16 %v558, %v556
        %v589 = vpack.c.bf16 %v559, %v557
        %v590 = vpack.c.bf16 %v562, %v560
        %v591 = vpack.c.bf16 %v563, %v561
        %v592 = vpack.c.bf16 %v566, %v564
        %v593 = vpack.c.bf16 %v567, %v565
        %v594 = vpack.c.bf16 %v570, %v568
        %v595 = vpack.c.bf16 %v571, %v569
        %v596 = vpack.c.bf16 %v574, %v572
        %v597 = vpack.c.bf16 %v575, %v573
        %v598 = vpack.c.bf16 %v578, %v576
        %v599 = vpack.c.bf16 %v579, %v577
        %v600 = vpack.c.bf16 %v582, %v580
        %v601 = vpack.c.bf16 %v583, %v581
        %v602 = vpack.c.bf16 %v586, %v584
        %v603 = vpack.c.bf16 %v587, %v585
        %v604 = vld [vmem:[%s4] sm:$0xf]
        %v605 = vld [vmem:[%s4 + $0x4] sm:$0xf]
        %v606 = vld [vmem:[%s4 + $0x8] sm:$0xf]
        %v607 = vld [vmem:[%s4 + $0xc] sm:$0xf]
        %v608 = vld [vmem:[%s4 + $0x10] sm:$0xf]
        %v609 = vld [vmem:[%s4 + $0x14] sm:$0xf]
        %v610 = vld [vmem:[%s4 + $0x18] sm:$0xf]
        %v611 = vld [vmem:[%s4 + $0x1c] sm:$0xf]
        %v612 = vld [vmem:[%s4 + $0x20] sm:$0xf]
        %v613 = vld [vmem:[%s4 + $0x24] sm:$0xf]
        %v614 = vld [vmem:[%s4 + $0x28] sm:$0xf]
        %v615 = vld [vmem:[%s4 + $0x2c] sm:$0xf]
        %v616 = vld [vmem:[%s4 + $0x30] sm:$0xf]
        %v617 = vld [vmem:[%s4 + $0x34] sm:$0xf]
        %v618 = vld [vmem:[%s4 + $0x38] sm:$0xf]
        %v619 = vld [vmem:[%s4 + $0x3c] sm:$0xf]
        %v620 = vld [vmem:[%s4 + $0x40] sm:$0xf]
        %v621 = vld [vmem:[%s4 + $0x44] sm:$0xf]
        %v622 = vld [vmem:[%s4 + $0x48] sm:$0xf]
        %v623 = vld [vmem:[%s4 + $0x4c] sm:$0xf]
        %v624 = vld [vmem:[%s4 + $0x50] sm:$0xf]
        %v625 = vld [vmem:[%s4 + $0x54] sm:$0xf]
        %v626 = vld [vmem:[%s4 + $0x58] sm:$0xf]
        %v627 = vld [vmem:[%s4 + $0x5c] sm:$0xf]
        %v628 = vld [vmem:[%s4 + $0x60] sm:$0xf]
        %v629 = vld [vmem:[%s4 + $0x64] sm:$0xf]
        %v630 = vld [vmem:[%s4 + $0x68] sm:$0xf]
        %v631 = vld [vmem:[%s4 + $0x6c] sm:$0xf]
        %v632 = vld [vmem:[%s4 + $0x70] sm:$0xf]
        %v633 = vld [vmem:[%s4 + $0x74] sm:$0xf]
        %v634 = vld [vmem:[%s4 + $0x78] sm:$0xf]
        %v635 = vld [vmem:[%s4 + $0x7c] sm:$0xf]
        %v668 = vunpack.c.l.b16 %v604
        %v669 = vunpack.c.l.b16 %v605
        %v670 = vunpack.c.l.b16 %v606
        %v671 = vunpack.c.l.b16 %v607
        %v672 = vunpack.c.l.b16 %v608
        %v673 = vunpack.c.l.b16 %v609
        %v674 = vunpack.c.l.b16 %v610
        %v675 = vunpack.c.l.b16 %v611
        %v676 = vunpack.c.l.b16 %v612
        %v677 = vunpack.c.l.b16 %v613
        %v678 = vunpack.c.l.b16 %v614
        %v679 = vunpack.c.l.b16 %v615
        %v680 = vunpack.c.l.b16 %v616
        %v681 = vunpack.c.l.b16 %v617
        %v682 = vunpack.c.l.b16 %v618
        %v683 = vunpack.c.l.b16 %v619
        %v684 = vunpack.c.l.b16 %v620
        %v685 = vunpack.c.l.b16 %v621
        %v686 = vunpack.c.l.b16 %v622
        %v687 = vunpack.c.l.b16 %v623
        %v688 = vunpack.c.l.b16 %v624
        %v689 = vunpack.c.l.b16 %v625
        %v690 = vunpack.c.l.b16 %v626
        %v691 = vunpack.c.l.b16 %v627
        %v692 = vunpack.c.l.b16 %v628
        %v693 = vunpack.c.l.b16 %v629
        %v694 = vunpack.c.l.b16 %v630
        %v695 = vunpack.c.l.b16 %v631
        %v696 = vunpack.c.l.b16 %v632
        %v697 = vunpack.c.l.b16 %v633
        %v698 = vunpack.c.l.b16 %v634
        %v699 = vunpack.c.l.b16 %v635
        %v700 = vpack.c.b16 %v669, %v668
        %v701 = vpack.c.b16 %v671, %v670
        %v702 = vpack.c.b16 %v673, %v672
        %v703 = vpack.c.b16 %v675, %v674
        %v704 = vpack.c.b16 %v677, %v676
        %v705 = vpack.c.b16 %v679, %v678
        %v706 = vpack.c.b16 %v681, %v680
        %v707 = vpack.c.b16 %v683, %v682
        %v708 = vpack.c.b16 %v685, %v684
        %v709 = vpack.c.b16 %v687, %v686
        %v710 = vpack.c.b16 %v689, %v688
        %v711 = vpack.c.b16 %v691, %v690
        %v712 = vpack.c.b16 %v693, %v692
        %v713 = vpack.c.b16 %v695, %v694
        %v714 = vpack.c.b16 %v697, %v696
        %v715 = vpack.c.b16 %v699, %v698
        %732 = vmatpush.bf16.msra.mxu0 %v707
        %733 = vmatpush.bf16.msra.mxu0 %v706
        %734 = vmatpush.bf16.msra.mxu0 %v705
        %735 = vmatpush.bf16.msra.mxu0 %v704
        %736 = vmatpush.bf16.msra.mxu0 %v703
        %737 = vmatpush.bf16.msra.mxu0 %v702
        %738 = vmatpush.bf16.msra.mxu0 %v701
        %739 = vmatpush.bf16.msra.mxu0 %v700
        %740 = vmatmul.bf16.gmra.mxu0 %v588
        %v741 = vpop.f32.mrf.mxu0
        %v742 = vadd.f32 0.0, %v741
        %v743 = vpop.f32.mrf.mxu0
        %v744 = vadd.f32 0.0, %v743
        %745 = vmatmul.bf16.gmra.mxu0 %v590
        %v746 = vpop.f32.mrf.mxu0
        %v747 = vadd.f32 0.0, %v746
        %v748 = vpop.f32.mrf.mxu0
        %v749 = vadd.f32 0.0, %v748
        %750 = vmatmul.bf16.gmra.mxu0 %v592
        %v751 = vpop.f32.mrf.mxu0
        %v752 = vadd.f32 0.0, %v751
        %v753 = vpop.f32.mrf.mxu0
        %v754 = vadd.f32 0.0, %v753
        %755 = vmatmul.bf16.gmra.mxu0 %v594
        %v756 = vpop.f32.mrf.mxu0
        %v757 = vadd.f32 0.0, %v756
        %v758 = vpop.f32.mrf.mxu0
        %v759 = vadd.f32 0.0, %v758
        %760 = vmatmul.bf16.gmra.mxu0 %v596
        %v761 = vpop.f32.mrf.mxu0
        %v762 = vadd.f32 0.0, %v761
        %v763 = vpop.f32.mrf.mxu0
        %v764 = vadd.f32 0.0, %v763
        %765 = vmatmul.bf16.gmra.mxu0 %v598
        %v766 = vpop.f32.mrf.mxu0
        %v767 = vadd.f32 0.0, %v766
        %v768 = vpop.f32.mrf.mxu0
        %v769 = vadd.f32 0.0, %v768
        %770 = vmatmul.bf16.gmra.mxu0 %v600
        %v771 = vpop.f32.mrf.mxu0
        %v772 = vadd.f32 0.0, %v771
        %v773 = vpop.f32.mrf.mxu0
        %v774 = vadd.f32 0.0, %v773
        %775 = vmatmul.bf16.gmra.mxu0 %v602
        %v776 = vpop.f32.mrf.mxu0
        %v777 = vadd.f32 0.0, %v776
        %v778 = vpop.f32.mrf.mxu0
        %v779 = vadd.f32 0.0, %v778
        %780 = vdwg.mxu0
        %781 = vmatpush.bf16.msra.mxu0 %v715
        %782 = vmatpush.bf16.msra.mxu0 %v714
        %783 = vmatpush.bf16.msra.mxu0 %v713
        %784 = vmatpush.bf16.msra.mxu0 %v712
        %785 = vmatpush.bf16.msra.mxu0 %v711
        %786 = vmatpush.bf16.msra.mxu0 %v710
        %787 = vmatpush.bf16.msra.mxu0 %v709
        %788 = vmatpush.bf16.msra.mxu0 %v708
        %789 = vmatmul.bf16.gmra.mxu0 %v589
        %v790 = vpop.f32.mrf.mxu0
        %v791 = vadd.f32 %v742, %v790
        %v792 = vpop.f32.mrf.mxu0
        %v793 = vadd.f32 %v744, %v792
        %794 = vmatmul.bf16.gmra.mxu0 %v591
        %v795 = vpop.f32.mrf.mxu0
        %v796 = vadd.f32 %v747, %v795
        %v797 = vpop.f32.mrf.mxu0
        %v798 = vadd.f32 %v749, %v797
        %799 = vmatmul.bf16.gmra.mxu0 %v593
        %v800 = vpop.f32.mrf.mxu0
        %v801 = vadd.f32 %v752, %v800
        %v802 = vpop.f32.mrf.mxu0
        %v803 = vadd.f32 %v754, %v802
        %804 = vmatmul.bf16.gmra.mxu0 %v595
        %v805 = vpop.f32.mrf.mxu0
        %v806 = vadd.f32 %v757, %v805
        %v807 = vpop.f32.mrf.mxu0
        %v808 = vadd.f32 %v759, %v807
        %809 = vmatmul.bf16.gmra.mxu0 %v597
        %v810 = vpop.f32.mrf.mxu0
        %v811 = vadd.f32 %v762, %v810
        %v812 = vpop.f32.mrf.mxu0
        %v813 = vadd.f32 %v764, %v812
        %814 = vmatmul.bf16.gmra.mxu0 %v599
        %v815 = vpop.f32.mrf.mxu0
        %v816 = vadd.f32 %v767, %v815
        %v817 = vpop.f32.mrf.mxu0
        %v818 = vadd.f32 %v769, %v817
        %819 = vmatmul.bf16.gmra.mxu0 %v601
        %v820 = vpop.f32.mrf.mxu0
        %v821 = vadd.f32 %v772, %v820
        %v822 = vpop.f32.mrf.mxu0
        %v823 = vadd.f32 %v774, %v822
        %824 = vmatmul.bf16.gmra.mxu0 %v603
        %v825 = vpop.f32.mrf.mxu0
        %v826 = vadd.f32 %v777, %v825
        %v827 = vpop.f32.mrf.mxu0
        %v828 = vadd.f32 %v779, %v827
        %829 = vdwg.mxu0
        %830 = vmatpush.bf16.msra.mxu0 %v707
        %831 = vmatpush.bf16.msra.mxu0 %v706
        %832 = vmatpush.bf16.msra.mxu0 %v705
        %833 = vmatpush.bf16.msra.mxu0 %v704
        %834 = vmatpush.bf16.msra.mxu0 %v703
        %835 = vmatpush.bf16.msra.mxu0 %v702
        %836 = vmatpush.bf16.msra.mxu0 %v701
        %837 = vmatpush.bf16.msra.mxu0 %v700
        %838 = vmatmul.bf16.gmra.mxu0 %v500
        %v839 = vpop.f32.mrf.mxu0
        %v840 = vadd.f32 %v791, %v839
        %v841 = vpop.f32.mrf.mxu0
        %v842 = vadd.f32 %v793, %v841
        %843 = vmatmul.bf16.gmra.mxu0 %v502
        %v844 = vpop.f32.mrf.mxu0
        %v845 = vadd.f32 %v796, %v844
        %v846 = vpop.f32.mrf.mxu0
        %v847 = vadd.f32 %v798, %v846
        %848 = vmatmul.bf16.gmra.mxu0 %v504
        %v849 = vpop.f32.mrf.mxu0
        %v850 = vadd.f32 %v801, %v849
        %v851 = vpop.f32.mrf.mxu0
        %v852 = vadd.f32 %v803, %v851
        %853 = vmatmul.bf16.gmra.mxu0 %v506
        %v854 = vpop.f32.mrf.mxu0
        %v855 = vadd.f32 %v806, %v854
        %v856 = vpop.f32.mrf.mxu0
        %v857 = vadd.f32 %v808, %v856
        %858 = vmatmul.bf16.gmra.mxu0 %v508
        %v859 = vpop.f32.mrf.mxu0
        %v860 = vadd.f32 %v811, %v859
        %v861 = vpop.f32.mrf.mxu0
        %v862 = vadd.f32 %v813, %v861
        %863 = vmatmul.bf16.gmra.mxu0 %v510
        %v864 = vpop.f32.mrf.mxu0
        %v865 = vadd.f32 %v816, %v864
        %v866 = vpop.f32.mrf.mxu0
        %v867 = vadd.f32 %v818, %v866
        %868 = vmatmul.bf16.gmra.mxu0 %v512
        %v869 = vpop.f32.mrf.mxu0
        %v870 = vadd.f32 %v821, %v869
        %v871 = vpop.f32.mrf.mxu0
        %v872 = vadd.f32 %v823, %v871
        %873 = vmatmul.bf16.gmra.mxu0 %v514
        %v874 = vpop.f32.mrf.mxu0
        %v875 = vadd.f32 %v826, %v874
        %v876 = vpop.f32.mrf.mxu0
        %v877 = vadd.f32 %v828, %v876
        %878 = vdwg.mxu0
        %879 = vmatpush.bf16.msra.mxu0 %v715
        %880 = vmatpush.bf16.msra.mxu0 %v714
        %881 = vmatpush.bf16.msra.mxu0 %v713
        %882 = vmatpush.bf16.msra.mxu0 %v712
        %883 = vmatpush.bf16.msra.mxu0 %v711
        %884 = vmatpush.bf16.msra.mxu0 %v710
        %885 = vmatpush.bf16.msra.mxu0 %v709
        %886 = vmatpush.bf16.msra.mxu0 %v708
        %887 = vmatmul.bf16.gmra.mxu0 %v501
        %v888 = vpop.f32.mrf.mxu0
        %v889 = vadd.f32 %v840, %v888
        %v890 = vpop.f32.mrf.mxu0
        %v891 = vadd.f32 %v842, %v890
        %892 = vmatmul.bf16.gmra.mxu0 %v503
        %v893 = vpop.f32.mrf.mxu0
        %v894 = vadd.f32 %v845, %v893
        %v895 = vpop.f32.mrf.mxu0
        %v896 = vadd.f32 %v847, %v895
        %897 = vmatmul.bf16.gmra.mxu0 %v505
        %v898 = vpop.f32.mrf.mxu0
        %v899 = vadd.f32 %v850, %v898
        %v900 = vpop.f32.mrf.mxu0
        %v901 = vadd.f32 %v852, %v900
        %902 = vmatmul.bf16.gmra.mxu0 %v507
        %v903 = vpop.f32.mrf.mxu0
        %v904 = vadd.f32 %v855, %v903
        %v905 = vpop.f32.mrf.mxu0
        %v906 = vadd.f32 %v857, %v905
        %907 = vmatmul.bf16.gmra.mxu0 %v509
        %v908 = vpop.f32.mrf.mxu0
        %v909 = vadd.f32 %v860, %v908
        %v910 = vpop.f32.mrf.mxu0
        %v911 = vadd.f32 %v862, %v910
        %912 = vmatmul.bf16.gmra.mxu0 %v511
        %v913 = vpop.f32.mrf.mxu0
        %v914 = vadd.f32 %v865, %v913
        %v915 = vpop.f32.mrf.mxu0
        %v916 = vadd.f32 %v867, %v915
        %917 = vmatmul.bf16.gmra.mxu0 %v513
        %v918 = vpop.f32.mrf.mxu0
        %v919 = vadd.f32 %v870, %v918
        %v920 = vpop.f32.mrf.mxu0
        %v921 = vadd.f32 %v872, %v920
        %922 = vmatmul.bf16.gmra.mxu0 %v515
        %v923 = vpop.f32.mrf.mxu0
        %v924 = vadd.f32 %v875, %v923
        %v925 = vpop.f32.mrf.mxu0
        %v926 = vadd.f32 %v877, %v925
        %927 = vdwg.mxu0
        %v928 = vld [vmem:[%s407] sm:$0xff]
        %v929 = vld [vmem:[%s407 + $0x8] sm:$0xff]
        %v930 = vld [vmem:[%s407 + $0x10] sm:$0xff]
        %v931 = vld [vmem:[%s407 + $0x18] sm:$0xff]
        %v932 = vld [vmem:[%s407 + $0x20] sm:$0xff]
        %v933 = vld [vmem:[%s407 + $0x28] sm:$0xff]
        %v934 = vld [vmem:[%s407 + $0x30] sm:$0xff]
        %v935 = vld [vmem:[%s407 + $0x38] sm:$0xff]
        %v936 = vld [vmem:[%s407 + $0x40] sm:$0xff]
        %v937 = vld [vmem:[%s407 + $0x48] sm:$0xff]
        %v938 = vld [vmem:[%s407 + $0x50] sm:$0xff]
        %v939 = vld [vmem:[%s407 + $0x58] sm:$0xff]
        %v940 = vld [vmem:[%s407 + $0x60] sm:$0xff]
        %v941 = vld [vmem:[%s407 + $0x68] sm:$0xff]
        %v942 = vld [vmem:[%s407 + $0x70] sm:$0xff]
        %v943 = vld [vmem:[%s407 + $0x78] sm:$0xff]
        %v944 = vld [vmem:[%s5] sm:$0xf]
        %v945 = vld [vmem:[%s5 + $0x4] sm:$0xf]
        %v946 = vld [vmem:[%s5 + $0x8] sm:$0xf]
        %v947 = vld [vmem:[%s5 + $0xc] sm:$0xf]
        %v948 = vld [vmem:[%s5 + $0x10] sm:$0xf]
        %v949 = vld [vmem:[%s5 + $0x14] sm:$0xf]
        %v950 = vld [vmem:[%s5 + $0x18] sm:$0xf]
        %v951 = vld [vmem:[%s5 + $0x1c] sm:$0xf]
        %v952 = vld [vmem:[%s5 + $0x20] sm:$0xf]
        %v953 = vld [vmem:[%s5 + $0x24] sm:$0xf]
        %v954 = vld [vmem:[%s5 + $0x28] sm:$0xf]
        %v955 = vld [vmem:[%s5 + $0x2c] sm:$0xf]
        %v956 = vld [vmem:[%s5 + $0x30] sm:$0xf]
        %v957 = vld [vmem:[%s5 + $0x34] sm:$0xf]
        %v958 = vld [vmem:[%s5 + $0x38] sm:$0xf]
        %v959 = vld [vmem:[%s5 + $0x3c] sm:$0xf]
        %v960 = vld [vmem:[%s5 + $0x40] sm:$0xf]
        %v961 = vld [vmem:[%s5 + $0x44] sm:$0xf]
        %v962 = vld [vmem:[%s5 + $0x48] sm:$0xf]
        %v963 = vld [vmem:[%s5 + $0x4c] sm:$0xf]
        %v964 = vld [vmem:[%s5 + $0x50] sm:$0xf]
        %v965 = vld [vmem:[%s5 + $0x54] sm:$0xf]
        %v966 = vld [vmem:[%s5 + $0x58] sm:$0xf]
        %v967 = vld [vmem:[%s5 + $0x5c] sm:$0xf]
        %v968 = vld [vmem:[%s5 + $0x60] sm:$0xf]
        %v969 = vld [vmem:[%s5 + $0x64] sm:$0xf]
        %v970 = vld [vmem:[%s5 + $0x68] sm:$0xf]
        %v971 = vld [vmem:[%s5 + $0x6c] sm:$0xf]
        %v972 = vld [vmem:[%s5 + $0x70] sm:$0xf]
        %v973 = vld [vmem:[%s5 + $0x74] sm:$0xf]
        %v974 = vld [vmem:[%s5 + $0x78] sm:$0xf]
        %v975 = vld [vmem:[%s5 + $0x7c] sm:$0xf]
        %v992 = vunpack.c.l.b16 %v928
        %v993 = vunpack.c.h.b16 %v928
        %v994 = vunpack.c.l.b16 %v929
        %v995 = vunpack.c.h.b16 %v929
        %v996 = vunpack.c.l.b16 %v930
        %v997 = vunpack.c.h.b16 %v930
        %v998 = vunpack.c.l.b16 %v931
        %v999 = vunpack.c.h.b16 %v931
        %v1000 = vunpack.c.l.b16 %v932
        %v1001 = vunpack.c.h.b16 %v932
        %v1002 = vunpack.c.l.b16 %v933
        %v1003 = vunpack.c.h.b16 %v933
        %v1004 = vunpack.c.l.b16 %v934
        %v1005 = vunpack.c.h.b16 %v934
        %v1006 = vunpack.c.l.b16 %v935
        %v1007 = vunpack.c.h.b16 %v935
        %v1008 = vunpack.c.l.b16 %v936
        %v1009 = vunpack.c.h.b16 %v936
        %v1010 = vunpack.c.l.b16 %v937
        %v1011 = vunpack.c.h.b16 %v937
        %v1012 = vunpack.c.l.b16 %v938
        %v1013 = vunpack.c.h.b16 %v938
        %v1014 = vunpack.c.l.b16 %v939
        %v1015 = vunpack.c.h.b16 %v939
        %v1016 = vunpack.c.l.b16 %v940
        %v1017 = vunpack.c.h.b16 %v940
        %v1018 = vunpack.c.l.b16 %v941
        %v1019 = vunpack.c.h.b16 %v941
        %v1020 = vunpack.c.l.b16 %v942
        %v1021 = vunpack.c.h.b16 %v942
        %v1022 = vunpack.c.l.b16 %v943
        %v1023 = vunpack.c.h.b16 %v943
        %v1024 = vpack.c.b16 %v994, %v992
        %v1025 = vpack.c.b16 %v995, %v993
        %v1026 = vpack.c.b16 %v998, %v996
        %v1027 = vpack.c.b16 %v999, %v997
        %v1028 = vpack.c.b16 %v1002, %v1000
        %v1029 = vpack.c.b16 %v1003, %v1001
        %v1030 = vpack.c.b16 %v1006, %v1004
        %v1031 = vpack.c.b16 %v1007, %v1005
        %v1032 = vpack.c.b16 %v1010, %v1008
        %v1033 = vpack.c.b16 %v1011, %v1009
        %v1034 = vpack.c.b16 %v1014, %v1012
        %v1035 = vpack.c.b16 %v1015, %v1013
        %v1036 = vpack.c.b16 %v1018, %v1016
        %v1037 = vpack.c.b16 %v1019, %v1017
        %v1038 = vpack.c.b16 %v1022, %v1020
        %v1039 = vpack.c.b16 %v1023, %v1021
        %v1088 = vunpack.c.l.b16 %v944
        %v1089 = vunpack.c.l.b16 %v945
        %v1090 = vunpack.c.l.b16 %v946
        %v1091 = vunpack.c.l.b16 %v947
        %v1092 = vunpack.c.l.b16 %v948
        %v1093 = vunpack.c.l.b16 %v949
        %v1094 = vunpack.c.l.b16 %v950
        %v1095 = vunpack.c.l.b16 %v951
        %v1096 = vunpack.c.l.b16 %v952
        %v1097 = vunpack.c.l.b16 %v953
        %v1098 = vunpack.c.l.b16 %v954
        %v1099 = vunpack.c.l.b16 %v955
        %v1100 = vunpack.c.l.b16 %v956
        %v1101 = vunpack.c.l.b16 %v957
        %v1102 = vunpack.c.l.b16 %v958
        %v1103 = vunpack.c.l.b16 %v959
        %v1104 = vunpack.c.l.b16 %v960
        %v1105 = vunpack.c.l.b16 %v961
        %v1106 = vunpack.c.l.b16 %v962
        %v1107 = vunpack.c.l.b16 %v963
        %v1108 = vunpack.c.l.b16 %v964
        %v1109 = vunpack.c.l.b16 %v965
        %v1110 = vunpack.c.l.b16 %v966
        %v1111 = vunpack.c.l.b16 %v967
        %v1112 = vunpack.c.l.b16 %v968
        %v1113 = vunpack.c.l.b16 %v969
        %v1114 = vunpack.c.l.b16 %v970
        %v1115 = vunpack.c.l.b16 %v971
        %v1116 = vunpack.c.l.b16 %v972
        %v1117 = vunpack.c.l.b16 %v973
        %v1118 = vunpack.c.l.b16 %v974
        %v1119 = vunpack.c.l.b16 %v975
        %v1120 = vpack.c.b16 %v1089, %v1088
        %v1121 = vpack.c.b16 %v1091, %v1090
        %v1122 = vpack.c.b16 %v1093, %v1092
        %v1123 = vpack.c.b16 %v1095, %v1094
        %v1124 = vpack.c.b16 %v1097, %v1096
        %v1125 = vpack.c.b16 %v1099, %v1098
        %v1126 = vpack.c.b16 %v1101, %v1100
        %v1127 = vpack.c.b16 %v1103, %v1102
        %v1128 = vpack.c.b16 %v1105, %v1104
        %v1129 = vpack.c.b16 %v1107, %v1106
        %v1130 = vpack.c.b16 %v1109, %v1108
        %v1131 = vpack.c.b16 %v1111, %v1110
        %v1132 = vpack.c.b16 %v1113, %v1112
        %v1133 = vpack.c.b16 %v1115, %v1114
        %v1134 = vpack.c.b16 %v1117, %v1116
        %v1135 = vpack.c.b16 %v1119, %v1118
        %1152 = vmatpush.bf16.msra.mxu0 %v1127
        %1153 = vmatpush.bf16.msra.mxu0 %v1126
        %1154 = vmatpush.bf16.msra.mxu0 %v1125
        %1155 = vmatpush.bf16.msra.mxu0 %v1124
        %1156 = vmatpush.bf16.msra.mxu0 %v1123
        %1157 = vmatpush.bf16.msra.mxu0 %v1122
        %1158 = vmatpush.bf16.msra.mxu0 %v1121
        %1159 = vmatpush.bf16.msra.mxu0 %v1120
        %1160 = vmatmul.bf16.gmra.mxu0 %v1024
        %v1161 = vpop.f32.mrf.mxu0
        %v1162 = vadd.f32 0.0, %v1161
        %v1163 = vpop.f32.mrf.mxu0
        %v1164 = vadd.f32 0.0, %v1163
        %1165 = vmatmul.bf16.gmra.mxu0 %v1026
        %v1166 = vpop.f32.mrf.mxu0
        %v1167 = vadd.f32 0.0, %v1166
        %v1168 = vpop.f32.mrf.mxu0
        %v1169 = vadd.f32 0.0, %v1168
        %1170 = vmatmul.bf16.gmra.mxu0 %v1028
        %v1171 = vpop.f32.mrf.mxu0
        %v1172 = vadd.f32 0.0, %v1171
        %v1173 = vpop.f32.mrf.mxu0
        %v1174 = vadd.f32 0.0, %v1173
        %1175 = vmatmul.bf16.gmra.mxu0 %v1030
        %v1176 = vpop.f32.mrf.mxu0
        %v1177 = vadd.f32 0.0, %v1176
        %v1178 = vpop.f32.mrf.mxu0
        %v1179 = vadd.f32 0.0, %v1178
        %1180 = vmatmul.bf16.gmra.mxu0 %v1032
        %v1181 = vpop.f32.mrf.mxu0
        %v1182 = vadd.f32 0.0, %v1181
        %v1183 = vpop.f32.mrf.mxu0
        %v1184 = vadd.f32 0.0, %v1183
        %1185 = vmatmul.bf16.gmra.mxu0 %v1034
        %v1186 = vpop.f32.mrf.mxu0
        %v1187 = vadd.f32 0.0, %v1186
        %v1188 = vpop.f32.mrf.mxu0
        %v1189 = vadd.f32 0.0, %v1188
        %1190 = vmatmul.bf16.gmra.mxu0 %v1036
        %v1191 = vpop.f32.mrf.mxu0
        %v1192 = vadd.f32 0.0, %v1191
        %v1193 = vpop.f32.mrf.mxu0
        %v1194 = vadd.f32 0.0, %v1193
        %1195 = vmatmul.bf16.gmra.mxu0 %v1038
        %v1196 = vpop.f32.mrf.mxu0
        %v1197 = vadd.f32 0.0, %v1196
        %v1198 = vpop.f32.mrf.mxu0
        %v1199 = vadd.f32 0.0, %v1198
        %1200 = vdwg.mxu0
        %1201 = vmatpush.bf16.msra.mxu0 %v1135
        %1202 = vmatpush.bf16.msra.mxu0 %v1134
        %1203 = vmatpush.bf16.msra.mxu0 %v1133
        %1204 = vmatpush.bf16.msra.mxu0 %v1132
        %1205 = vmatpush.bf16.msra.mxu0 %v1131
        %1206 = vmatpush.bf16.msra.mxu0 %v1130
        %1207 = vmatpush.bf16.msra.mxu0 %v1129
        %1208 = vmatpush.bf16.msra.mxu0 %v1128
        %1209 = vmatmul.bf16.gmra.mxu0 %v1025
        %v1210 = vpop.f32.mrf.mxu0
        %v1211 = vadd.f32 %v1162, %v1210
        %v1212 = vpop.f32.mrf.mxu0
        %v1213 = vadd.f32 %v1164, %v1212
        %1214 = vmatmul.bf16.gmra.mxu0 %v1027
        %v1215 = vpop.f32.mrf.mxu0
        %v1216 = vadd.f32 %v1167, %v1215
        %v1217 = vpop.f32.mrf.mxu0
        %v1218 = vadd.f32 %v1169, %v1217
        %1219 = vmatmul.bf16.gmra.mxu0 %v1029
        %v1220 = vpop.f32.mrf.mxu0
        %v1221 = vadd.f32 %v1172, %v1220
        %v1222 = vpop.f32.mrf.mxu0
        %v1223 = vadd.f32 %v1174, %v1222
        %1224 = vmatmul.bf16.gmra.mxu0 %v1031
        %v1225 = vpop.f32.mrf.mxu0
        %v1226 = vadd.f32 %v1177, %v1225
        %v1227 = vpop.f32.mrf.mxu0
        %v1228 = vadd.f32 %v1179, %v1227
        %1229 = vmatmul.bf16.gmra.mxu0 %v1033
        %v1230 = vpop.f32.mrf.mxu0
        %v1231 = vadd.f32 %v1182, %v1230
        %v1232 = vpop.f32.mrf.mxu0
        %v1233 = vadd.f32 %v1184, %v1232
        %1234 = vmatmul.bf16.gmra.mxu0 %v1035
        %v1235 = vpop.f32.mrf.mxu0
        %v1236 = vadd.f32 %v1187, %v1235
        %v1237 = vpop.f32.mrf.mxu0
        %v1238 = vadd.f32 %v1189, %v1237
        %1239 = vmatmul.bf16.gmra.mxu0 %v1037
        %v1240 = vpop.f32.mrf.mxu0
        %v1241 = vadd.f32 %v1192, %v1240
        %v1242 = vpop.f32.mrf.mxu0
        %v1243 = vadd.f32 %v1194, %v1242
        %1244 = vmatmul.bf16.gmra.mxu0 %v1039
        %v1245 = vpop.f32.mrf.mxu0
        %v1246 = vadd.f32 %v1197, %v1245
        %v1247 = vpop.f32.mrf.mxu0
        %v1248 = vadd.f32 %v1199, %v1247
        %1249 = vdwg.mxu0
        %v1250 = vld [vmem:[%s414] sm:$0xff]
        %v1251 = vld [vmem:[%s414 + $0x8] sm:$0xff]
        %v1252 = vld [vmem:[%s414 + $0x10] sm:$0xff]
        %v1253 = vld [vmem:[%s414 + $0x18] sm:$0xff]
        %v1254 = vld [vmem:[%s414 + $0x20] sm:$0xff]
        %v1255 = vld [vmem:[%s414 + $0x28] sm:$0xff]
        %v1256 = vld [vmem:[%s414 + $0x30] sm:$0xff]
        %v1257 = vld [vmem:[%s414 + $0x38] sm:$0xff]
        %v1258 = vld [vmem:[%s414 + $0x40] sm:$0xff]
        %v1259 = vld [vmem:[%s414 + $0x48] sm:$0xff]
        %v1260 = vld [vmem:[%s414 + $0x50] sm:$0xff]
        %v1261 = vld [vmem:[%s414 + $0x58] sm:$0xff]
        %v1262 = vld [vmem:[%s414 + $0x60] sm:$0xff]
        %v1263 = vld [vmem:[%s414 + $0x68] sm:$0xff]
        %v1264 = vld [vmem:[%s414 + $0x70] sm:$0xff]
        %v1265 = vld [vmem:[%s414 + $0x78] sm:$0xff]
        %v1266 = vld [vmem:[%s6] sm:$0xf]
        %v1267 = vld [vmem:[%s6 + $0x4] sm:$0xf]
        %v1268 = vld [vmem:[%s6 + $0x8] sm:$0xf]
        %v1269 = vld [vmem:[%s6 + $0xc] sm:$0xf]
        %v1270 = vld [vmem:[%s6 + $0x10] sm:$0xf]
        %v1271 = vld [vmem:[%s6 + $0x14] sm:$0xf]
        %v1272 = vld [vmem:[%s6 + $0x18] sm:$0xf]
        %v1273 = vld [vmem:[%s6 + $0x1c] sm:$0xf]
        %v1274 = vld [vmem:[%s6 + $0x20] sm:$0xf]
        %v1275 = vld [vmem:[%s6 + $0x24] sm:$0xf]
        %v1276 = vld [vmem:[%s6 + $0x28] sm:$0xf]
        %v1277 = vld [vmem:[%s6 + $0x2c] sm:$0xf]
        %v1278 = vld [vmem:[%s6 + $0x30] sm:$0xf]
        %v1279 = vld [vmem:[%s6 + $0x34] sm:$0xf]
        %v1280 = vld [vmem:[%s6 + $0x38] sm:$0xf]
        %v1281 = vld [vmem:[%s6 + $0x3c] sm:$0xf]
        %v1282 = vld [vmem:[%s6 + $0x40] sm:$0xf]
        %v1283 = vld [vmem:[%s6 + $0x44] sm:$0xf]
        %v1284 = vld [vmem:[%s6 + $0x48] sm:$0xf]
        %v1285 = vld [vmem:[%s6 + $0x4c] sm:$0xf]
        %v1286 = vld [vmem:[%s6 + $0x50] sm:$0xf]
        %v1287 = vld [vmem:[%s6 + $0x54] sm:$0xf]
        %v1288 = vld [vmem:[%s6 + $0x58] sm:$0xf]
        %v1289 = vld [vmem:[%s6 + $0x5c] sm:$0xf]
        %v1290 = vld [vmem:[%s6 + $0x60] sm:$0xf]
        %v1291 = vld [vmem:[%s6 + $0x64] sm:$0xf]
        %v1292 = vld [vmem:[%s6 + $0x68] sm:$0xf]
        %v1293 = vld [vmem:[%s6 + $0x6c] sm:$0xf]
        %v1294 = vld [vmem:[%s6 + $0x70] sm:$0xf]
        %v1295 = vld [vmem:[%s6 + $0x74] sm:$0xf]
        %v1296 = vld [vmem:[%s6 + $0x78] sm:$0xf]
        %v1297 = vld [vmem:[%s6 + $0x7c] sm:$0xf]
        %v1314 = vunpack.c.l.b16 %v1250
        %v1315 = vunpack.c.h.b16 %v1250
        %v1316 = vunpack.c.l.b16 %v1251
        %v1317 = vunpack.c.h.b16 %v1251
        %v1318 = vunpack.c.l.b16 %v1252
        %v1319 = vunpack.c.h.b16 %v1252
        %v1320 = vunpack.c.l.b16 %v1253
        %v1321 = vunpack.c.h.b16 %v1253
        %v1322 = vunpack.c.l.b16 %v1254
        %v1323 = vunpack.c.h.b16 %v1254
        %v1324 = vunpack.c.l.b16 %v1255
        %v1325 = vunpack.c.h.b16 %v1255
        %v1326 = vunpack.c.l.b16 %v1256
        %v1327 = vunpack.c.h.b16 %v1256
        %v1328 = vunpack.c.l.b16 %v1257
        %v1329 = vunpack.c.h.b16 %v1257
        %v1330 = vunpack.c.l.b16 %v1258
        %v1331 = vunpack.c.h.b16 %v1258
        %v1332 = vunpack.c.l.b16 %v1259
        %v1333 = vunpack.c.h.b16 %v1259
        %v1334 = vunpack.c.l.b16 %v1260
        %v1335 = vunpack.c.h.b16 %v1260
        %v1336 = vunpack.c.l.b16 %v1261
        %v1337 = vunpack.c.h.b16 %v1261
        %v1338 = vunpack.c.l.b16 %v1262
        %v1339 = vunpack.c.h.b16 %v1262
        %v1340 = vunpack.c.l.b16 %v1263
        %v1341 = vunpack.c.h.b16 %v1263
        %v1342 = vunpack.c.l.b16 %v1264
        %v1343 = vunpack.c.h.b16 %v1264
        %v1344 = vunpack.c.l.b16 %v1265
        %v1345 = vunpack.c.h.b16 %v1265
        %v1346 = vpack.c.b16 %v1316, %v1314
        %v1347 = vpack.c.b16 %v1317, %v1315
        %v1348 = vpack.c.b16 %v1320, %v1318
        %v1349 = vpack.c.b16 %v1321, %v1319
        %v1350 = vpack.c.b16 %v1324, %v1322
        %v1351 = vpack.c.b16 %v1325, %v1323
        %v1352 = vpack.c.b16 %v1328, %v1326
        %v1353 = vpack.c.b16 %v1329, %v1327
        %v1354 = vpack.c.b16 %v1332, %v1330
        %v1355 = vpack.c.b16 %v1333, %v1331
        %v1356 = vpack.c.b16 %v1336, %v1334
        %v1357 = vpack.c.b16 %v1337, %v1335
        %v1358 = vpack.c.b16 %v1340, %v1338
        %v1359 = vpack.c.b16 %v1341, %v1339
        %v1360 = vpack.c.b16 %v1344, %v1342
        %v1361 = vpack.c.b16 %v1345, %v1343
        %v1410 = vunpack.c.l.b16 %v1266
        %v1411 = vunpack.c.l.b16 %v1267
        %v1412 = vunpack.c.l.b16 %v1268
        %v1413 = vunpack.c.l.b16 %v1269
        %v1414 = vunpack.c.l.b16 %v1270
        %v1415 = vunpack.c.l.b16 %v1271
        %v1416 = vunpack.c.l.b16 %v1272
        %v1417 = vunpack.c.l.b16 %v1273
        %v1418 = vunpack.c.l.b16 %v1274
        %v1419 = vunpack.c.l.b16 %v1275
        %v1420 = vunpack.c.l.b16 %v1276
        %v1421 = vunpack.c.l.b16 %v1277
        %v1422 = vunpack.c.l.b16 %v1278
        %v1423 = vunpack.c.l.b16 %v1279
        %v1424 = vunpack.c.l.b16 %v1280
        %v1425 = vunpack.c.l.b16 %v1281
        %v1426 = vunpack.c.l.b16 %v1282
        %v1427 = vunpack.c.l.b16 %v1283
        %v1428 = vunpack.c.l.b16 %v1284
        %v1429 = vunpack.c.l.b16 %v1285
        %v1430 = vunpack.c.l.b16 %v1286
        %v1431 = vunpack.c.l.b16 %v1287
        %v1432 = vunpack.c.l.b16 %v1288
        %v1433 = vunpack.c.l.b16 %v1289
        %v1434 = vunpack.c.l.b16 %v1290
        %v1435 = vunpack.c.l.b16 %v1291
        %v1436 = vunpack.c.l.b16 %v1292
        %v1437 = vunpack.c.l.b16 %v1293
        %v1438 = vunpack.c.l.b16 %v1294
        %v1439 = vunpack.c.l.b16 %v1295
        %v1440 = vunpack.c.l.b16 %v1296
        %v1441 = vunpack.c.l.b16 %v1297
        %v1442 = vpack.c.b16 %v1411, %v1410
        %v1443 = vpack.c.b16 %v1413, %v1412
        %v1444 = vpack.c.b16 %v1415, %v1414
        %v1445 = vpack.c.b16 %v1417, %v1416
        %v1446 = vpack.c.b16 %v1419, %v1418
        %v1447 = vpack.c.b16 %v1421, %v1420
        %v1448 = vpack.c.b16 %v1423, %v1422
        %v1449 = vpack.c.b16 %v1425, %v1424
        %v1450 = vpack.c.b16 %v1427, %v1426
        %v1451 = vpack.c.b16 %v1429, %v1428
        %v1452 = vpack.c.b16 %v1431, %v1430
        %v1453 = vpack.c.b16 %v1433, %v1432
        %v1454 = vpack.c.b16 %v1435, %v1434
        %v1455 = vpack.c.b16 %v1437, %v1436
        %v1456 = vpack.c.b16 %v1439, %v1438
        %v1457 = vpack.c.b16 %v1441, %v1440
        %1474 = vmatpush.bf16.msra.mxu0 %v1449
        %1475 = vmatpush.bf16.msra.mxu0 %v1448
        %1476 = vmatpush.bf16.msra.mxu0 %v1447
        %1477 = vmatpush.bf16.msra.mxu0 %v1446
        %1478 = vmatpush.bf16.msra.mxu0 %v1445
        %1479 = vmatpush.bf16.msra.mxu0 %v1444
        %1480 = vmatpush.bf16.msra.mxu0 %v1443
        %1481 = vmatpush.bf16.msra.mxu0 %v1442
        %1482 = vmatmul.bf16.gmra.mxu0 %v1346
        %v1483 = vpop.f32.mrf.mxu0
        %v1484 = vadd.f32 0.0, %v1483
        %v1485 = vpop.f32.mrf.mxu0
        %v1486 = vadd.f32 0.0, %v1485
        %1487 = vmatmul.bf16.gmra.mxu0 %v1348
        %v1488 = vpop.f32.mrf.mxu0
        %v1489 = vadd.f32 0.0, %v1488
        %v1490 = vpop.f32.mrf.mxu0
        %v1491 = vadd.f32 0.0, %v1490
        %1492 = vmatmul.bf16.gmra.mxu0 %v1350
        %v1493 = vpop.f32.mrf.mxu0
        %v1494 = vadd.f32 0.0, %v1493
        %v1495 = vpop.f32.mrf.mxu0
        %v1496 = vadd.f32 0.0, %v1495
        %1497 = vmatmul.bf16.gmra.mxu0 %v1352
        %v1498 = vpop.f32.mrf.mxu0
        %v1499 = vadd.f32 0.0, %v1498
        %v1500 = vpop.f32.mrf.mxu0
        %v1501 = vadd.f32 0.0, %v1500
        %1502 = vmatmul.bf16.gmra.mxu0 %v1354
        %v1503 = vpop.f32.mrf.mxu0
        %v1504 = vadd.f32 0.0, %v1503
        %v1505 = vpop.f32.mrf.mxu0
        %v1506 = vadd.f32 0.0, %v1505
        %1507 = vmatmul.bf16.gmra.mxu0 %v1356
        %v1508 = vpop.f32.mrf.mxu0
        %v1509 = vadd.f32 0.0, %v1508
        %v1510 = vpop.f32.mrf.mxu0
        %v1511 = vadd.f32 0.0, %v1510
        %1512 = vmatmul.bf16.gmra.mxu0 %v1358
        %v1513 = vpop.f32.mrf.mxu0
        %v1514 = vadd.f32 0.0, %v1513
        %v1515 = vpop.f32.mrf.mxu0
        %v1516 = vadd.f32 0.0, %v1515
        %1517 = vmatmul.bf16.gmra.mxu0 %v1360
        %v1518 = vpop.f32.mrf.mxu0
        %v1519 = vadd.f32 0.0, %v1518
        %v1520 = vpop.f32.mrf.mxu0
        %v1521 = vadd.f32 0.0, %v1520
        %1522 = vdwg.mxu0
        %1523 = vmatpush.bf16.msra.mxu0 %v1457
        %1524 = vmatpush.bf16.msra.mxu0 %v1456
        %1525 = vmatpush.bf16.msra.mxu0 %v1455
        %1526 = vmatpush.bf16.msra.mxu0 %v1454
        %1527 = vmatpush.bf16.msra.mxu0 %v1453
        %1528 = vmatpush.bf16.msra.mxu0 %v1452
        %1529 = vmatpush.bf16.msra.mxu0 %v1451
        %1530 = vmatpush.bf16.msra.mxu0 %v1450
        %1531 = vmatmul.bf16.gmra.mxu0 %v1347
        %v1532 = vpop.f32.mrf.mxu0
        %v1533 = vadd.f32 %v1484, %v1532
        %v1534 = vpop.f32.mrf.mxu0
        %v1535 = vadd.f32 %v1486, %v1534
        %1536 = vmatmul.bf16.gmra.mxu0 %v1349
        %v1537 = vpop.f32.mrf.mxu0
        %v1538 = vadd.f32 %v1489, %v1537
        %v1539 = vpop.f32.mrf.mxu0
        %v1540 = vadd.f32 %v1491, %v1539
        %1541 = vmatmul.bf16.gmra.mxu0 %v1351
        %v1542 = vpop.f32.mrf.mxu0
        %v1543 = vadd.f32 %v1494, %v1542
        %v1544 = vpop.f32.mrf.mxu0
        %v1545 = vadd.f32 %v1496, %v1544
        %1546 = vmatmul.bf16.gmra.mxu0 %v1353
        %v1547 = vpop.f32.mrf.mxu0
        %v1548 = vadd.f32 %v1499, %v1547
        %v1549 = vpop.f32.mrf.mxu0
        %v1550 = vadd.f32 %v1501, %v1549
        %1551 = vmatmul.bf16.gmra.mxu0 %v1355
        %v1552 = vpop.f32.mrf.mxu0
        %v1553 = vadd.f32 %v1504, %v1552
        %v1554 = vpop.f32.mrf.mxu0
        %v1555 = vadd.f32 %v1506, %v1554
        %1556 = vmatmul.bf16.gmra.mxu0 %v1357
        %v1557 = vpop.f32.mrf.mxu0
        %v1558 = vadd.f32 %v1509, %v1557
        %v1559 = vpop.f32.mrf.mxu0
        %v1560 = vadd.f32 %v1511, %v1559
        %1561 = vmatmul.bf16.gmra.mxu0 %v1359
        %v1562 = vpop.f32.mrf.mxu0
        %v1563 = vadd.f32 %v1514, %v1562
        %v1564 = vpop.f32.mrf.mxu0
        %v1565 = vadd.f32 %v1516, %v1564
        %1566 = vmatmul.bf16.gmra.mxu0 %v1361
        %v1567 = vpop.f32.mrf.mxu0
        %v1568 = vadd.f32 %v1519, %v1567
        %v1569 = vpop.f32.mrf.mxu0
        %v1570 = vadd.f32 %v1521, %v1569
        %1571 = vdwg.mxu0
        %v1572 = vld [vmem:[%s420] sm:$0xff]
        %v1573 = vld [vmem:[%s420 + $0x8] sm:$0xff]
        %v1574 = vld [vmem:[%s420 + $0x10] sm:$0xff]
        %v1575 = vld [vmem:[%s420 + $0x18] sm:$0xff]
        %v1576 = vld [vmem:[%s420 + $0x20] sm:$0xff]
        %v1577 = vld [vmem:[%s420 + $0x28] sm:$0xff]
        %v1578 = vld [vmem:[%s420 + $0x30] sm:$0xff]
        %v1579 = vld [vmem:[%s420 + $0x38] sm:$0xff]
        %v1580 = vld [vmem:[%s420 + $0x40] sm:$0xff]
        %v1581 = vld [vmem:[%s420 + $0x48] sm:$0xff]
        %v1582 = vld [vmem:[%s420 + $0x50] sm:$0xff]
        %v1583 = vld [vmem:[%s420 + $0x58] sm:$0xff]
        %v1584 = vld [vmem:[%s420 + $0x60] sm:$0xff]
        %v1585 = vld [vmem:[%s420 + $0x68] sm:$0xff]
        %v1586 = vld [vmem:[%s420 + $0x70] sm:$0xff]
        %v1587 = vld [vmem:[%s420 + $0x78] sm:$0xff]
        %1604 = vrot.lane.b32.xlu0 %v1211, 8
        %v1605 = vpop.permute.xlu0 %1604
        %1606 = vrot.lane.b32.xlu0 %v1213, 8
        %v1607 = vpop.permute.xlu0 %1606
        %1608 = vrot.lane.b32.xlu0 %v1216, 8
        %v1609 = vpop.permute.xlu0 %1608
        %1610 = vrot.lane.b32.xlu0 %v1218, 8
        %v1611 = vpop.permute.xlu0 %1610
        %1612 = vrot.lane.b32.xlu0 %v1221, 8
        %v1613 = vpop.permute.xlu0 %1612
        %1614 = vrot.lane.b32.xlu0 %v1223, 8
        %v1615 = vpop.permute.xlu0 %1614
        %1616 = vrot.lane.b32.xlu0 %v1226, 8
        %v1617 = vpop.permute.xlu0 %1616
        %1618 = vrot.lane.b32.xlu0 %v1228, 8
        %v1619 = vpop.permute.xlu0 %1618
        %1620 = vrot.lane.b32.xlu0 %v1231, 8
        %v1621 = vpop.permute.xlu0 %1620
        %1622 = vrot.lane.b32.xlu0 %v1233, 8
        %v1623 = vpop.permute.xlu0 %1622
        %1624 = vrot.lane.b32.xlu0 %v1236, 8
        %v1625 = vpop.permute.xlu0 %1624
        %1626 = vrot.lane.b32.xlu0 %v1238, 8
        %v1627 = vpop.permute.xlu0 %1626
        %1628 = vrot.lane.b32.xlu0 %v1241, 8
        %v1629 = vpop.permute.xlu0 %1628
        %1630 = vrot.lane.b32.xlu0 %v1243, 8
        %v1631 = vpop.permute.xlu0 %1630
        %1632 = vrot.lane.b32.xlu0 %v1246, 8
        %v1633 = vpop.permute.xlu0 %1632
        %1634 = vrot.lane.b32.xlu0 %v1248, 8
        %v1635 = vpop.permute.xlu0 %1634
        %v1652 = vadd.f32 %v889, %v1605
        %v1653 = vadd.f32 %v891, %v1607
        %v1654 = vadd.f32 %v894, %v1609
        %v1655 = vadd.f32 %v896, %v1611
        %v1656 = vadd.f32 %v899, %v1613
        %v1657 = vadd.f32 %v901, %v1615
        %v1658 = vadd.f32 %v904, %v1617
        %v1659 = vadd.f32 %v906, %v1619
        %v1660 = vadd.f32 %v909, %v1621
        %v1661 = vadd.f32 %v911, %v1623
        %v1662 = vadd.f32 %v914, %v1625
        %v1663 = vadd.f32 %v916, %v1627
        %v1664 = vadd.f32 %v919, %v1629
        %v1665 = vadd.f32 %v921, %v1631
        %v1666 = vadd.f32 %v924, %v1633
        %v1667 = vadd.f32 %v926, %v1635
        %1684 = vrot.lane.b32.xlu0 %v1572, 1
        %v1685 = vpop.permute.xlu0 %1684
        %1686 = vrot.lane.b32.xlu0 %v1573, 1
        %v1687 = vpop.permute.xlu0 %1686
        %1688 = vrot.lane.b32.xlu0 %v1574, 1
        %v1689 = vpop.permute.xlu0 %1688
        %1690 = vrot.lane.b32.xlu0 %v1575, 1
        %v1691 = vpop.permute.xlu0 %1690
        %1692 = vrot.lane.b32.xlu0 %v1576, 1
        %v1693 = vpop.permute.xlu0 %1692
        %1694 = vrot.lane.b32.xlu0 %v1577, 1
        %v1695 = vpop.permute.xlu0 %1694
        %1696 = vrot.lane.b32.xlu0 %v1578, 1
        %v1697 = vpop.permute.xlu0 %1696
        %1698 = vrot.lane.b32.xlu0 %v1579, 1
        %v1699 = vpop.permute.xlu0 %1698
        %1700 = vrot.lane.b32.xlu0 %v1580, 1
        %v1701 = vpop.permute.xlu0 %1700
        %1702 = vrot.lane.b32.xlu0 %v1581, 1
        %v1703 = vpop.permute.xlu0 %1702
        %1704 = vrot.lane.b32.xlu0 %v1582, 1
        %v1705 = vpop.permute.xlu0 %1704
        %1706 = vrot.lane.b32.xlu0 %v1583, 1
        %v1707 = vpop.permute.xlu0 %1706
        %1708 = vrot.lane.b32.xlu0 %v1584, 1
        %v1709 = vpop.permute.xlu0 %1708
        %1710 = vrot.lane.b32.xlu0 %v1585, 1
        %v1711 = vpop.permute.xlu0 %1710
        %1712 = vrot.lane.b32.xlu0 %v1586, 1
        %v1713 = vpop.permute.xlu0 %1712
        %1714 = vrot.lane.b32.xlu0 %v1587, 1
        %v1715 = vpop.permute.xlu0 %1714
        %v1732 = vmul.f32 %v1211, %v1685
        %v1733 = vmul.f32 %v1213, %v1687
        %v1734 = vmul.f32 %v1216, %v1689
        %v1735 = vmul.f32 %v1218, %v1691
        %v1736 = vmul.f32 %v1221, %v1693
        %v1737 = vmul.f32 %v1223, %v1695
        %v1738 = vmul.f32 %v1226, %v1697
        %v1739 = vmul.f32 %v1228, %v1699
        %v1740 = vmul.f32 %v1231, %v1701
        %v1741 = vmul.f32 %v1233, %v1703
        %v1742 = vmul.f32 %v1236, %v1705
        %v1743 = vmul.f32 %v1238, %v1707
        %v1744 = vmul.f32 %v1241, %v1709
        %v1745 = vmul.f32 %v1243, %v1711
        %v1746 = vmul.f32 %v1246, %v1713
        %v1747 = vmul.f32 %v1248, %v1715
        %1764 = vrot.lane.b32.xlu0 %v1732, 7
        %v1765 = vpop.permute.xlu0 %1764
        %1766 = vrot.lane.b32.xlu0 %v1733, 7
        %v1767 = vpop.permute.xlu0 %1766
        %1768 = vrot.lane.b32.xlu0 %v1734, 7
        %v1769 = vpop.permute.xlu0 %1768
        %1770 = vrot.lane.b32.xlu0 %v1735, 7
        %v1771 = vpop.permute.xlu0 %1770
        %1772 = vrot.lane.b32.xlu0 %v1736, 7
        %v1773 = vpop.permute.xlu0 %1772
        %1774 = vrot.lane.b32.xlu0 %v1737, 7
        %v1775 = vpop.permute.xlu0 %1774
        %1776 = vrot.lane.b32.xlu0 %v1738, 7
        %v1777 = vpop.permute.xlu0 %1776
        %1778 = vrot.lane.b32.xlu0 %v1739, 7
        %v1779 = vpop.permute.xlu0 %1778
        %1780 = vrot.lane.b32.xlu0 %v1740, 7
        %v1781 = vpop.permute.xlu0 %1780
        %1782 = vrot.lane.b32.xlu0 %v1741, 7
        %v1783 = vpop.permute.xlu0 %1782
        %1784 = vrot.lane.b32.xlu0 %v1742, 7
        %v1785 = vpop.permute.xlu0 %1784
        %1786 = vrot.lane.b32.xlu0 %v1743, 7
        %v1787 = vpop.permute.xlu0 %1786
        %1788 = vrot.lane.b32.xlu0 %v1744, 7
        %v1789 = vpop.permute.xlu0 %1788
        %1790 = vrot.lane.b32.xlu0 %v1745, 7
        %v1791 = vpop.permute.xlu0 %1790
        %1792 = vrot.lane.b32.xlu0 %v1746, 7
        %v1793 = vpop.permute.xlu0 %1792
        %1794 = vrot.lane.b32.xlu0 %v1747, 7
        %v1795 = vpop.permute.xlu0 %1794
        %v1812 = vsub.f32 %v1652, %v1765
        %v1813 = vsub.f32 %v1653, %v1767
        %v1814 = vsub.f32 %v1654, %v1769
        %v1815 = vsub.f32 %v1655, %v1771
        %v1816 = vsub.f32 %v1656, %v1773
        %v1817 = vsub.f32 %v1657, %v1775
        %v1818 = vsub.f32 %v1658, %v1777
        %v1819 = vsub.f32 %v1659, %v1779
        %v1820 = vsub.f32 %v1660, %v1781
        %v1821 = vsub.f32 %v1661, %v1783
        %v1822 = vsub.f32 %v1662, %v1785
        %v1823 = vsub.f32 %v1663, %v1787
        %v1824 = vsub.f32 %v1664, %v1789
        %v1825 = vsub.f32 %v1665, %v1791
        %v1826 = vsub.f32 %v1666, %v1793
        %v1827 = vsub.f32 %v1667, %v1795
        %1844 = vrot.lane.b32.xlu0 %v1533, 8
        %v1845 = vpop.permute.xlu0 %1844
        %1846 = vrot.lane.b32.xlu0 %v1535, 8
        %v1847 = vpop.permute.xlu0 %1846
        %1848 = vrot.lane.b32.xlu0 %v1538, 8
        %v1849 = vpop.permute.xlu0 %1848
        %1850 = vrot.lane.b32.xlu0 %v1540, 8
        %v1851 = vpop.permute.xlu0 %1850
        %1852 = vrot.lane.b32.xlu0 %v1543, 8
        %v1853 = vpop.permute.xlu0 %1852
        %1854 = vrot.lane.b32.xlu0 %v1545, 8
        %v1855 = vpop.permute.xlu0 %1854
        %1856 = vrot.lane.b32.xlu0 %v1548, 8
        %v1857 = vpop.permute.xlu0 %1856
        %1858 = vrot.lane.b32.xlu0 %v1550, 8
        %v1859 = vpop.permute.xlu0 %1858
        %1860 = vrot.lane.b32.xlu0 %v1553, 8
        %v1861 = vpop.permute.xlu0 %1860
        %1862 = vrot.lane.b32.xlu0 %v1555, 8
        %v1863 = vpop.permute.xlu0 %1862
        %1864 = vrot.lane.b32.xlu0 %v1558, 8
        %v1865 = vpop.permute.xlu0 %1864
        %1866 = vrot.lane.b32.xlu0 %v1560, 8
        %v1867 = vpop.permute.xlu0 %1866
        %1868 = vrot.lane.b32.xlu0 %v1563, 8
        %v1869 = vpop.permute.xlu0 %1868
        %1870 = vrot.lane.b32.xlu0 %v1565, 8
        %v1871 = vpop.permute.xlu0 %1870
        %1872 = vrot.lane.b32.xlu0 %v1568, 8
        %v1873 = vpop.permute.xlu0 %1872
        %1874 = vrot.lane.b32.xlu0 %v1570, 8
        %v1875 = vpop.permute.xlu0 %1874
        %v1892 = vadd.f32 %v1812, %v1845
        %v1893 = vadd.f32 %v1813, %v1847
        %v1894 = vadd.f32 %v1814, %v1849
        %v1895 = vadd.f32 %v1815, %v1851
        %v1896 = vadd.f32 %v1816, %v1853
        %v1897 = vadd.f32 %v1817, %v1855
        %v1898 = vadd.f32 %v1818, %v1857
        %v1899 = vadd.f32 %v1819, %v1859
        %v1900 = vadd.f32 %v1820, %v1861
        %v1901 = vadd.f32 %v1821, %v1863
        %v1902 = vadd.f32 %v1822, %v1865
        %v1903 = vadd.f32 %v1823, %v1867
        %v1904 = vadd.f32 %v1824, %v1869
        %v1905 = vadd.f32 %v1825, %v1871
        %v1906 = vadd.f32 %v1826, %v1873
        %v1907 = vadd.f32 %v1827, %v1875
        %v1908 = vmul.f32 %v1533, %v1572
        %v1909 = vmul.f32 %v1535, %v1573
        %v1910 = vmul.f32 %v1538, %v1574
        %v1911 = vmul.f32 %v1540, %v1575
        %v1912 = vmul.f32 %v1543, %v1576
        %v1913 = vmul.f32 %v1545, %v1577
        %v1914 = vmul.f32 %v1548, %v1578
        %v1915 = vmul.f32 %v1550, %v1579
        %v1916 = vmul.f32 %v1553, %v1580
        %v1917 = vmul.f32 %v1555, %v1581
        %v1918 = vmul.f32 %v1558, %v1582
        %v1919 = vmul.f32 %v1560, %v1583
        %v1920 = vmul.f32 %v1563, %v1584
        %v1921 = vmul.f32 %v1565, %v1585
        %v1922 = vmul.f32 %v1568, %v1586
        %v1923 = vmul.f32 %v1570, %v1587
        %1940 = vrot.lane.b32.xlu0 %v1908, 7
        %v1941 = vpop.permute.xlu0 %1940
        %1942 = vrot.lane.b32.xlu0 %v1909, 7
        %v1943 = vpop.permute.xlu0 %1942
        %1944 = vrot.lane.b32.xlu0 %v1910, 7
        %v1945 = vpop.permute.xlu0 %1944
        %1946 = vrot.lane.b32.xlu0 %v1911, 7
        %v1947 = vpop.permute.xlu0 %1946
        %1948 = vrot.lane.b32.xlu0 %v1912, 7
        %v1949 = vpop.permute.xlu0 %1948
        %1950 = vrot.lane.b32.xlu0 %v1913, 7
        %v1951 = vpop.permute.xlu0 %1950
        %1952 = vrot.lane.b32.xlu0 %v1914, 7
        %v1953 = vpop.permute.xlu0 %1952
        %1954 = vrot.lane.b32.xlu0 %v1915, 7
        %v1955 = vpop.permute.xlu0 %1954
        %1956 = vrot.lane.b32.xlu0 %v1916, 7
        %v1957 = vpop.permute.xlu0 %1956
        %1958 = vrot.lane.b32.xlu0 %v1917, 7
        %v1959 = vpop.permute.xlu0 %1958
        %1960 = vrot.lane.b32.xlu0 %v1918, 7
        %v1961 = vpop.permute.xlu0 %1960
        %1962 = vrot.lane.b32.xlu0 %v1919, 7
        %v1963 = vpop.permute.xlu0 %1962
        %1964 = vrot.lane.b32.xlu0 %v1920, 7
        %v1965 = vpop.permute.xlu0 %1964
        %1966 = vrot.lane.b32.xlu0 %v1921, 7
        %v1967 = vpop.permute.xlu0 %1966
        %1968 = vrot.lane.b32.xlu0 %v1922, 7
        %v1969 = vpop.permute.xlu0 %1968
        %1970 = vrot.lane.b32.xlu0 %v1923, 7
        %v1971 = vpop.permute.xlu0 %1970
        %v1988 = vsub.f32 %v1892, %v1941
        %v1989 = vsub.f32 %v1893, %v1943
        %v1990 = vsub.f32 %v1894, %v1945
        %v1991 = vsub.f32 %v1895, %v1947
        %v1992 = vsub.f32 %v1896, %v1949
        %v1993 = vsub.f32 %v1897, %v1951
        %v1994 = vsub.f32 %v1898, %v1953
        %v1995 = vsub.f32 %v1899, %v1955
        %v1996 = vsub.f32 %v1900, %v1957
        %v1997 = vsub.f32 %v1901, %v1959
        %v1998 = vsub.f32 %v1902, %v1961
        %v1999 = vsub.f32 %v1903, %v1963
        %v2000 = vsub.f32 %v1904, %v1965
        %v2001 = vsub.f32 %v1905, %v1967
        %v2002 = vsub.f32 %v1906, %v1969
        %v2003 = vsub.f32 %v1907, %v1971
        %2004 = vrot.lane.b32.xlu0 %v1572, 6
        %v2005 = vpop.permute.xlu0 %2004
        %2006 = vrot.lane.b32.xlu0 %v1573, 6
        %v2007 = vpop.permute.xlu0 %2006
        %2008 = vrot.lane.b32.xlu0 %v1574, 6
        %v2009 = vpop.permute.xlu0 %2008
        %2010 = vrot.lane.b32.xlu0 %v1575, 6
        %v2011 = vpop.permute.xlu0 %2010
        %2012 = vrot.lane.b32.xlu0 %v1576, 6
        %v2013 = vpop.permute.xlu0 %2012
        %2014 = vrot.lane.b32.xlu0 %v1577, 6
        %v2015 = vpop.permute.xlu0 %2014
        %2016 = vrot.lane.b32.xlu0 %v1578, 6
        %v2017 = vpop.permute.xlu0 %2016
        %2018 = vrot.lane.b32.xlu0 %v1579, 6
        %v2019 = vpop.permute.xlu0 %2018
        %2020 = vrot.lane.b32.xlu0 %v1580, 6
        %v2021 = vpop.permute.xlu0 %2020
        %2022 = vrot.lane.b32.xlu0 %v1581, 6
        %v2023 = vpop.permute.xlu0 %2022
        %2024 = vrot.lane.b32.xlu0 %v1582, 6
        %v2025 = vpop.permute.xlu0 %2024
        %2026 = vrot.lane.b32.xlu0 %v1583, 6
        %v2027 = vpop.permute.xlu0 %2026
        %2028 = vrot.lane.b32.xlu0 %v1584, 6
        %v2029 = vpop.permute.xlu0 %2028
        %2030 = vrot.lane.b32.xlu0 %v1585, 6
        %v2031 = vpop.permute.xlu0 %2030
        %2032 = vrot.lane.b32.xlu0 %v1586, 6
        %v2033 = vpop.permute.xlu0 %2032
        %2034 = vrot.lane.b32.xlu0 %v1587, 6
        %v2035 = vpop.permute.xlu0 %2034
        %v2052 = vadd.f32 %v1988, %v2005
        %v2053 = vadd.f32 %v1989, %v2007
        %v2054 = vadd.f32 %v1990, %v2009
        %v2055 = vadd.f32 %v1991, %v2011
        %v2056 = vadd.f32 %v1992, %v2013
        %v2057 = vadd.f32 %v1993, %v2015
        %v2058 = vadd.f32 %v1994, %v2017
        %v2059 = vadd.f32 %v1995, %v2019
        %v2060 = vadd.f32 %v1996, %v2021
        %v2061 = vadd.f32 %v1997, %v2023
        %v2062 = vadd.f32 %v1998, %v2025
        %v2063 = vadd.f32 %v1999, %v2027
        %v2064 = vadd.f32 %v2000, %v2029
        %v2065 = vadd.f32 %v2001, %v2031
        %v2066 = vadd.f32 %v2002, %v2033
        %v2067 = vadd.f32 %v2003, %v2035
        %vm2068 = vcmask 64512
        %2069 = vst.msk [vmem:[%s426] sm:$0xff] %vm2068, %v889
        %2070 = vst.msk [vmem:[%s426 + $0x8] sm:$0xff] %vm2068, %v891
        %2071 = vst.msk [vmem:[%s426 + $0x10] sm:$0xff] %vm2068, %v894
        %2072 = vst.msk [vmem:[%s426 + $0x18] sm:$0xff] %vm2068, %v896
        %2073 = vst.msk [vmem:[%s426 + $0x20] sm:$0xff] %vm2068, %v899
        %2074 = vst.msk [vmem:[%s426 + $0x28] sm:$0xff] %vm2068, %v901
        %2075 = vst.msk [vmem:[%s426 + $0x30] sm:$0xff] %vm2068, %v904
        %2076 = vst.msk [vmem:[%s426 + $0x38] sm:$0xff] %vm2068, %v906
        %2077 = vst.msk [vmem:[%s426 + $0x40] sm:$0xff] %vm2068, %v909
        %2078 = vst.msk [vmem:[%s426 + $0x48] sm:$0xff] %vm2068, %v911
        %2079 = vst.msk [vmem:[%s426 + $0x50] sm:$0xff] %vm2068, %v914
        %2080 = vst.msk [vmem:[%s426 + $0x58] sm:$0xff] %vm2068, %v916
        %2081 = vst.msk [vmem:[%s426 + $0x60] sm:$0xff] %vm2068, %v919
        %2082 = vst.msk [vmem:[%s426 + $0x68] sm:$0xff] %vm2068, %v921
        %2083 = vst.msk [vmem:[%s426 + $0x70] sm:$0xff] %vm2068, %v924
        %2084 = vst.msk [vmem:[%s426 + $0x78] sm:$0xff] %vm2068, %v926
        %vm2085 = vcmask 72768
        %2086 = vst.msk [vmem:[%s426] sm:$0xff] %vm2085, %v2052
        %2087 = vst.msk [vmem:[%s426 + $0x8] sm:$0xff] %vm2085, %v2053
        %2088 = vst.msk [vmem:[%s426 + $0x10] sm:$0xff] %vm2085, %v2054
        %2089 = vst.msk [vmem:[%s426 + $0x18] sm:$0xff] %vm2085, %v2055
        %2090 = vst.msk [vmem:[%s426 + $0x20] sm:$0xff] %vm2085, %v2056
        %2091 = vst.msk [vmem:[%s426 + $0x28] sm:$0xff] %vm2085, %v2057
        %2092 = vst.msk [vmem:[%s426 + $0x30] sm:$0xff] %vm2085, %v2058
        %2093 = vst.msk [vmem:[%s426 + $0x38] sm:$0xff] %vm2085, %v2059
        %2094 = vst.msk [vmem:[%s426 + $0x40] sm:$0xff] %vm2085, %v2060
        %2095 = vst.msk [vmem:[%s426 + $0x48] sm:$0xff] %vm2085, %v2061
        %2096 = vst.msk [vmem:[%s426 + $0x50] sm:$0xff] %vm2085, %v2062
        %2097 = vst.msk [vmem:[%s426 + $0x58] sm:$0xff] %vm2085, %v2063
        %2098 = vst.msk [vmem:[%s426 + $0x60] sm:$0xff] %vm2085, %v2064
        %2099 = vst.msk [vmem:[%s426 + $0x68] sm:$0xff] %vm2085, %v2065
        %2100 = vst.msk [vmem:[%s426 + $0x70] sm:$0xff] %vm2085, %v2066
        %2101 = vst.msk [vmem:[%s426 + $0x78] sm:$0xff] %vm2085, %v2067
        %s2102 = smul.u32 16, %s22
        %p2103 = scmp.lt.s32.totalorder %s2102, 31
        %s2104 = scalar_select %p2103, %s2102, 31
        %s2105 = smul.addr %s2104, 8
        %s2106 = scalar_lea.vmem %s8, %s2105
        // Predicated region
        $region57: #{tpu_custom_call.1} parent=51 // pred_check
          %p2107 = pneg %p233
        $region58: #{tpu_custom_call.1} parent=51 // pred_check_branch
          %2109 = sbr.rel (%p2107) target = $region60
        $region59: #{tpu_custom_call.1} parent=51 // pred_region
          %s2110 = smul.u32 16, %s22
        $region60: #{tpu_custom_call.1} parent=51 // pred_fallthru
          _
      $region52: #{tpu_custom_call.1} parent=5 // pred_fallthru
        _
      %p2111 = scmp.le.s32.totalorder 2, %s17
      // Predicated region
      $region61: #{tpu_custom_call.1} parent=5 // pred_check
        %p2112 = pneg %p2111
      $region62: #{tpu_custom_call.1} parent=5 // pred_check_branch
        %2114 = sbr.rel (%p2112) target = $region64
      $region63: #{tpu_custom_call.1} parent=5 // pred_region
        %s2115 = ssub.s32 %s17, 2
        // Predicated region
        $region65: #{tpu_custom_call.1} parent=63 // pred_check
          %p2116 = pneg %p239
        $region66: #{tpu_custom_call.1} parent=63 // pred_check_branch
          %2118 = sbr.rel (%p2116) target = $region68
        $region67: #{tpu_custom_call.1} parent=63 // pred_region
          %s2119 = smul.u32 16, %s23
          %p2120 = scmp.lt.s32.totalorder %s2119, 31
          %s2121 = scalar_select %p2120, %s2119, 31
          %s2122 = smul.addr %s2121, 8
          %s2123 = scalar_lea.vmem %s8, %s2122
        $region68: #{tpu_custom_call.1} parent=63 // pred_fallthru
          _
      $region64: #{tpu_custom_call.1} parent=5 // pred_fallthru
        _
    $region6: #{tpu_custom_call.1} parent=1 // loop_footer
      %s21 = sadd.s32 1, %s17
    $region7: #{tpu_custom_call.1} parent=1 // loop_footer_branch
      %16 = sbr.rel target = $region3
    $region8: #{tpu_custom_call.1} parent=1 // loop_exit
      _
    %2124 = vsyncpa [#allocation3], 1
    %s2125 = scalar_lea.sflag [#allocation3], 1
    %2126 = vsyncpa %s2125, 1

</llo_original>
